<compile_context>
chip_gen: v7x
topology: tpu7x:2x2x1
jax: 0.10.0
libtpu: 0.0.40
codegen_flags: <defaults>
</compile_context>

<pallas_src>
import math

import numpy as np
import jax
import jax.numpy as jnp
from jax import lax
from jax.experimental import pallas as pl
from jax.experimental.pallas import tpu as pltpu

BN_EPS = 1e-5
_INV_SQRT2 = 1.0 / math.sqrt(2.0)
_SQRT_2_OVER_PI = math.sqrt(2.0 / math.pi)


def _round_up(n, m):
    return ((n + m - 1) // m) * m


def _gelu_exact(x):
    # exact GELU (matches nn.GELU() default, erf-based) — reference only
    return 0.5 * x * (1.0 + lax.erf(x * _INV_SQRT2))


def _gelu_tanh(x):
    # tanh approximation: tanh lowers to the EUP slot (otherwise idle here)
    return 0.5 * x * (1.0 + jnp.tanh(_SQRT_2_OVER_PI * (x + 0.044715 * x * x * x)))


# ----------------------------------------------------------------------------
# Pallas kernel: whole network as a chain of fused matmul + shift (+ GELU).
# refs = (x, w_0, shift_0, ..., w_{L-1}, shift_{L-1}, out); GELU on all but
# the last layer.  bf16 MXU operands, f32 accumulation, bf16 between layers.
# ----------------------------------------------------------------------------
def _doodles_kernel(*refs):
    x_ref = refs[0]
    o_ref = refs[-1]
    layer_refs = refs[1:-1]
    n_layers = len(layer_refs) // 2

    a = x_ref[...]                                    # (TM, K0) bf16
    for li in range(n_layers):
        w_ref = layer_refs[2 * li]                    # (K, N) bf16
        s_ref = layer_refs[2 * li + 1]                # (1, N) f32
        acc = jnp.dot(a, w_ref[...], preferred_element_type=jnp.float32)
        y = acc + s_ref[...]
        if li < n_layers - 1:
            a = _gelu_tanh(y).astype(jnp.bfloat16)    # bf16 between layers
        else:
            a = y                                     # final logits in f32
    o_ref[...] = a.astype(o_ref.dtype)


# ----------------------------------------------------------------------------
# Trace-time construction of the per-layer dense operators (pure weight math).
# ----------------------------------------------------------------------------
def _tap_selection(H, W, stride):
    """0/1 selection matrices S[(kh*3+kw), out_pos, in_pos] for a 3x3 conv,
    padding=1, given stride (zero padding folded in as all-zero rows)."""
    Ho = (H + 2 - 3) // stride + 1
    Wo = (W + 2 - 3) // stride + 1
    S = np.zeros((9, Ho * Wo, H * W), np.float32)
    for kh in range(3):
        for kw in range(3):
            t = kh * 3 + kw
            for ho in range(Ho):
                h = ho * stride + kh - 1
                if not (0 <= h < H):
                    continue
                for wo in range(Wo):
                    w = wo * stride + kw - 1
                    if 0 <= w < W:
                        S[t, ho * Wo + wo, h * W + w] = 1.0
    return S, Ho, Wo


def prepare_kernel_params(params, image_size, channels_in, num_classes):
    """Build kernel-ready (bf16 weight, f32 shift) pairs, one per fused layer."""
    H, W = image_size
    C = channels_in
    mats, vecs = [], []

    for li, p in enumerate(params["conv"]):
        C_out = p["w"].shape[0]
        stride = p["stride"]
        S, Ho, Wo = _tap_selection(H, W, stride)
        # Fold eval-mode BatchNorm + conv bias into per-channel scale/shift,
        # then fold the scale into the weights.
        scale = p["gamma"] / jnp.sqrt(p["var"] + BN_EPS)
        shift = p["beta"] + scale * (p["b"] - p["mean"])
        # (C_out, C_in, 3, 3) -> (kh, kw, C_in, C_out) -> (9, C_in, C_out)
        w_taps = jnp.transpose(p["w"], (2, 3, 1, 0)).reshape(9, C, C_out)
        w_taps = w_taps * scale[None, None, :]
        # Dense conv operator.  Output columns are NHWC-flattened (p, c_out).
        if li == 0:
            # Rows in NCHW-flatten order (c, h, w): absorbs the input
            # permutation, so the wrapper only reshapes (no transpose).
            kmat = jnp.einsum("tpq,tcd->cqpd", jnp.asarray(S), w_taps)
        else:
            # Rows in NHWC-flatten order (h, w, c): matches prev-layer output.
            kmat = jnp.einsum("tpq,tcd->qcpd", jnp.asarray(S), w_taps)
        kmat = kmat.reshape(H * W * C, Ho * Wo * C_out)
        shift_row = jnp.tile(shift[None, :], (Ho * Wo, 1)).reshape(
            1, Ho * Wo * C_out)
        mats.append(kmat)
        vecs.append(shift_row)
        H, W, C = Ho, Wo, C_out

    # fc1: permute rows from PyTorch NCHW-flatten order to our NHWC-flatten
    # order (absorbs the Flatten transpose), and pad hidden 64 -> 128 lanes.
    hidden = params["fc"][0]["w"].shape[0]
    hidden_p = _round_up(hidden, 128)
    w1 = params["fc"][0]["w"].reshape(hidden, C, H, W)
    w1 = jnp.transpose(w1, (0, 2, 3, 1)).reshape(hidden, H * W * C).T
    w1p = jnp.zeros((H * W * C, hidden_p), jnp.float32)
    w1p = w1p.at[:, :hidden].set(w1)
    b1p = jnp.zeros((1, hidden_p), jnp.float32)
    b1p = b1p.at[:, :hidden].set(params["fc"][0]["b"])
    mats.append(w1p)
    vecs.append(b1p)

    # fc2: pad class dim to 128 lanes (unmasked stores) and rows to hidden_p.
    # Padded hidden lanes are GELU(0)=0 and hit zero weight rows -> exact.
    n_pad = _round_up(max(num_classes, 1), 128)
    w2 = jnp.zeros((hidden_p, n_pad), jnp.float32)
    w2 = w2.at[:hidden, :num_classes].set(params["fc"][1]["w"].T)
    b2 = jnp.zeros((1, n_pad), jnp.float32)
    b2 = b2.at[:, :num_classes].set(params["fc"][1]["b"])
    mats.append(w2)
    vecs.append(b2)

    # Pad the network input feature dim to a lane multiple.
    k0 = mats[0].shape[0]
    k0p = _round_up(k0, 128)
    if k0p != k0:
        mats[0] = jnp.pad(mats[0], ((0, k0p - k0), (0, 0)))

    mats = [m.astype(jnp.bfloat16) for m in mats]
    vecs = [v.astype(jnp.float32) for v in vecs]
    return {
        "mats": mats,
        "vecs": vecs,
        "k_in": k0,
        "k_in_padded": k0p,
        "num_classes": num_classes,
        "out_padded": n_pad,
    }


# ----------------------------------------------------------------------------
# Batch tiling: amortize per-step overhead, keep >=2 tiles for v7x megacore.
# ----------------------------------------------------------------------------
def _choose_tiling(B):
    if B <= 16:
        tm = 16                                  # native bf16 (16,128) tile
        bp = 16
    elif B <= 512:
        tm = _round_up(-(-B // 2), 16)           # ceil(B/2), sublane-aligned
        bp = 2 * tm                              # exactly two grid steps
    else:
        tm = 256
        bp = _round_up(B, 2 * tm)                # even step count
    return tm, bp


# ----------------------------------------------------------------------------
# Forward pass: one pallas_call.
# ----------------------------------------------------------------------------
def doodles_forward(x_nchw, kp):
    B = x_nchw.shape[0]
    # NCHW flatten only — the (c,h,w)->(h,w,c) permutation is folded into
    # the first conv operator's rows, so no transpose on the activation path.
    x = x_nchw.reshape(B, -1).astype(jnp.float32)
    k0, k0p = kp["k_in"], kp["k_in_padded"]
    assert x.shape[1] == k0, (x.shape, k0)

    tm, bp = _choose_tiling(B)
    x = jnp.pad(x, ((0, bp - B), (0, k0p - k0))).astype(jnp.bfloat16)

    mats, vecs = kp["mats"], kp["vecs"]
    n_out = kp["out_padded"]

    in_specs = [pl.BlockSpec((tm, k0p), lambda i: (i, 0))]
    args = [x]
    for m, v in zip(mats, vecs):
        in_specs.append(pl.BlockSpec(m.shape, lambda i: (0, 0)))
        in_specs.append(pl.BlockSpec(v.shape, lambda i: (0, 0)))
        args.append(m)
        args.append(v)

    out = pl.pallas_call(
        _doodles_kernel,
        out_shape=jax.ShapeDtypeStruct((bp, n_out), jnp.float32),
        grid=(bp // tm,),
        in_specs=in_specs,
        out_specs=pl.BlockSpec((tm, n_out), lambda i: (i, 0)),
        compiler_params=pltpu.CompilerParams(
            dimension_semantics=("parallel",)),
    )(*args)
    return out[:B, :kp["num_classes"]]


# ----------------------------------------------------------------------------
# Parameter construction (deterministic, synthetic) + pure-JAX f32 reference.
# ----------------------------------------------------------------------------
def init_params(key, image_size, channels_in, hidden_layers, num_classes):
    params = {"conv": [], "fc": []}
    c_in = channels_in
    H, W = image_size
    for i, c_out in enumerate(hidden_layers):
        stride = 2 if i == 0 or hidden_layers[i] != hidden_layers[i - 1] else 1
        key, kw, kb, kg, kbt, km, kv = jax.random.split(key, 7)
        params["conv"].append({
            "stride": stride,
            "w": 0.1 * jax.random.normal(kw, (c_out, c_in, 3, 3), jnp.float32),
            "b": 0.1 * jax.random.normal(kb, (c_out,), jnp.float32),
            "gamma": 1.0 + 0.1 * jax.random.normal(kg, (c_out,), jnp.float32),
            "beta": 0.1 * jax.random.normal(kbt, (c_out,), jnp.float32),
            "mean": 0.1 * jax.random.normal(km, (c_out,), jnp.float32),
            "var": jax.random.uniform(kv, (c_out,), jnp.float32, 0.5, 1.5),
        })
        c_in = c_out
        H = (H + 2 - 3) // stride + 1
        W = (W + 2 - 3) // stride + 1
    conv_output_size = c_in * H * W
    for din, dout in [(conv_output_size, 64), (64, num_classes)]:
        key, kw, kb = jax.random.split(key, 3)
        params["fc"].append({
            "w": 0.1 * jax.random.normal(kw, (dout, din), jnp.float32),
            "b": 0.1 * jax.random.normal(kb, (dout,), jnp.float32),
        })
    return params, conv_output_size


def reference_forward(x_nchw, params):
    """Straightforward f32 reference mirroring the PyTorch module (eval)."""
    x = x_nchw.astype(jnp.float32)
    for p in params["conv"]:
        s = p["stride"]
        x = lax.conv_general_dilated(
            x, p["w"], window_strides=(s, s), padding=((1, 1), (1, 1)),
            dimension_numbers=("NCHW", "OIHW", "NCHW"))
        x = x + p["b"][None, :, None, None]
        scale = (p["gamma"] / jnp.sqrt(p["var"] + BN_EPS))[None, :, None, None]
        x = (x - p["mean"][None, :, None, None]) * scale \
            + p["beta"][None, :, None, None]
        x = _gelu_exact(x)
    flat = x.reshape(x.shape[0], -1)                 # NCHW flatten order
    h = _gelu_exact(flat @ params["fc"][0]["w"].T + params["fc"][0]["b"])
    return h @ params["fc"][1]["w"].T + params["fc"][1]["b"]


if __name__ == "__main__":
    image_size = (16, 16)
    channels_in = 1   # _get_conv_output_size uses a 1-channel dummy -> grayscale
    hidden_layers = [8, 8, 16]
    num_classes = 10
    batch = 2

    key = jax.random.PRNGKey(0)
    key, kparams, kx = jax.random.split(key, 3)
    params, conv_out_size = init_params(kparams, image_size, channels_in,
                                        hidden_layers, num_classes)
    kp = prepare_kernel_params(params, image_size, channels_in, num_classes)

    x = jax.random.normal(kx, (batch, channels_in, *image_size), jnp.float32)

    logits = doodles_forward(x, kp)
    logits = jax.block_until_ready(logits)
    assert logits.shape == (batch, num_classes), logits.shape
    assert bool(jnp.all(jnp.isfinite(logits)))

    ref = reference_forward(x, params)
    max_err = float(jnp.max(jnp.abs(logits - ref)))
    assert bool(jnp.allclose(logits, ref, rtol=5e-2, atol=5e-2)), max_err

    print("KERNEL_OK")
</pallas_src>

<mosaic_0001>
module attributes {stable_mosaic.version = 11 : i64} {
  func.func @_doodles_kernel(%arg0: i32, %arg1: memref<16x256xbf16, #tpu.memory_space<vmem>>, %arg2: memref<256x512xbf16, #tpu.memory_space<vmem>>, %arg3: memref<1x512xf32, #tpu.memory_space<vmem>>, %arg4: memref<512x512xbf16, #tpu.memory_space<vmem>>, %arg5: memref<1x512xf32, #tpu.memory_space<vmem>>, %arg6: memref<512x256xbf16, #tpu.memory_space<vmem>>, %arg7: memref<1x256xf32, #tpu.memory_space<vmem>>, %arg8: memref<256x128xbf16, #tpu.memory_space<vmem>>, %arg9: memref<1x128xf32, #tpu.memory_space<vmem>>, %arg10: memref<128x128xbf16, #tpu.memory_space<vmem>>, %arg11: memref<1x128xf32, #tpu.memory_space<vmem>>, %arg12: memref<16x128xf32, #tpu.memory_space<vmem>>) attributes {dimension_semantics = [#tpu.dimension_semantics<parallel>], iteration_bounds = array<i64: 1>, scalar_prefetch = 0 : i64, scratch_operands = 0 : i64, tpu.core_type = #tpu.core_type<tc>, window_params = [{transform_indices = @transform_0, window_bounds = array<i64: 16, 256>}, {pipeline_mode = #tpu.pipeline_mode<synchronous>, transform_indices = @transform_1, window_bounds = array<i64: 256, 512>}, {pipeline_mode = #tpu.pipeline_mode<synchronous>, transform_indices = @transform_2, window_bounds = array<i64: 1, 512>}, {pipeline_mode = #tpu.pipeline_mode<synchronous>, transform_indices = @transform_3, window_bounds = array<i64: 512, 512>}, {pipeline_mode = #tpu.pipeline_mode<synchronous>, transform_indices = @transform_4, window_bounds = array<i64: 1, 512>}, {pipeline_mode = #tpu.pipeline_mode<synchronous>, transform_indices = @transform_5, window_bounds = array<i64: 512, 256>}, {pipeline_mode = #tpu.pipeline_mode<synchronous>, transform_indices = @transform_6, window_bounds = array<i64: 1, 256>}, {pipeline_mode = #tpu.pipeline_mode<synchronous>, transform_indices = @transform_7, window_bounds = array<i64: 256, 128>}, {pipeline_mode = #tpu.pipeline_mode<synchronous>, transform_indices = @transform_8, window_bounds = array<i64: 1, 128>}, {pipeline_mode = #tpu.pipeline_mode<synchronous>, transform_indices = @transform_9, window_bounds = array<i64: 128, 128>}, {pipeline_mode = #tpu.pipeline_mode<synchronous>, transform_indices = @transform_10, window_bounds = array<i64: 1, 128>}, {transform_indices = @transform_11, window_bounds = array<i64: 16, 128>}]} {
    %c0 = arith.constant 0 : index
    %c0_0 = arith.constant 0 : index
    %0 = vector.load %arg1[%c0, %c0_0] : memref<16x256xbf16, #tpu.memory_space<vmem>>, vector<16x256xbf16>
    %c0_1 = arith.constant 0 : index
    %c0_2 = arith.constant 0 : index
    %1 = vector.load %arg2[%c0_1, %c0_2] : memref<256x512xbf16, #tpu.memory_space<vmem>>, vector<256x512xbf16>
    %cst = arith.constant dense<0.000000e+00> : vector<16x512xf32>
    %2 = tpu.matmul %0, %1, %cst {dimension_numbers = #tpu.dot_dimension_numbers<[1], [0], [0], [1], [0, 0, 1, 1], [], []>} : vector<16x256xbf16>, vector<256x512xbf16>, vector<16x512xf32> -> vector<16x512xf32>
    %c0_3 = arith.constant 0 : index
    %c0_4 = arith.constant 0 : index
    %3 = vector.load %arg3[%c0_3, %c0_4] : memref<1x512xf32, #tpu.memory_space<vmem>>, vector<1x512xf32>
    %4 = vector.broadcast %3 : vector<1x512xf32> to vector<16x512xf32>
    %5 = arith.addf %2, %4 : vector<16x512xf32>
    %cst_5 = arith.constant 5.000000e-01 : f32
    %6 = vector.broadcast %cst_5 : f32 to vector<16x512xf32>
    %7 = arith.mulf %6, %5 : vector<16x512xf32>
    %cst_6 = arith.constant 4.471500e-02 : f32
    %8 = vector.broadcast %cst_6 : f32 to vector<16x512xf32>
    %9 = arith.mulf %8, %5 : vector<16x512xf32>
    %10 = arith.mulf %9, %5 : vector<16x512xf32>
    %11 = arith.mulf %10, %5 : vector<16x512xf32>
    %12 = arith.addf %5, %11 : vector<16x512xf32>
    %cst_7 = arith.constant 0.797884583 : f32
    %13 = vector.broadcast %cst_7 : f32 to vector<16x512xf32>
    %14 = arith.mulf %13, %12 : vector<16x512xf32>
    %15 = math.tanh %14 : vector<16x512xf32>
    %cst_8 = arith.constant 1.000000e+00 : f32
    %16 = vector.broadcast %cst_8 : f32 to vector<16x512xf32>
    %17 = arith.addf %16, %15 : vector<16x512xf32>
    %18 = arith.mulf %7, %17 : vector<16x512xf32>
    %19 = arith.truncf %18 : vector<16x512xf32> to vector<16x512xbf16>
    %c0_9 = arith.constant 0 : index
    %c0_10 = arith.constant 0 : index
    %20 = vector.load %arg4[%c0_9, %c0_10] : memref<512x512xbf16, #tpu.memory_space<vmem>>, vector<512x512xbf16>
    %cst_11 = arith.constant dense<0.000000e+00> : vector<16x512xf32>
    %21 = tpu.matmul %19, %20, %cst_11 {dimension_numbers = #tpu.dot_dimension_numbers<[1], [0], [0], [1], [0, 0, 1, 1], [], []>} : vector<16x512xbf16>, vector<512x512xbf16>, vector<16x512xf32> -> vector<16x512xf32>
    %c0_12 = arith.constant 0 : index
    %c0_13 = arith.constant 0 : index
    %22 = vector.load %arg5[%c0_12, %c0_13] : memref<1x512xf32, #tpu.memory_space<vmem>>, vector<1x512xf32>
    %23 = vector.broadcast %22 : vector<1x512xf32> to vector<16x512xf32>
    %24 = arith.addf %21, %23 : vector<16x512xf32>
    %cst_14 = arith.constant 5.000000e-01 : f32
    %25 = vector.broadcast %cst_14 : f32 to vector<16x512xf32>
    %26 = arith.mulf %25, %24 : vector<16x512xf32>
    %cst_15 = arith.constant 4.471500e-02 : f32
    %27 = vector.broadcast %cst_15 : f32 to vector<16x512xf32>
    %28 = arith.mulf %27, %24 : vector<16x512xf32>
    %29 = arith.mulf %28, %24 : vector<16x512xf32>
    %30 = arith.mulf %29, %24 : vector<16x512xf32>
    %31 = arith.addf %24, %30 : vector<16x512xf32>
    %cst_16 = arith.constant 0.797884583 : f32
    %32 = vector.broadcast %cst_16 : f32 to vector<16x512xf32>
    %33 = arith.mulf %32, %31 : vector<16x512xf32>
    %34 = math.tanh %33 : vector<16x512xf32>
    %cst_17 = arith.constant 1.000000e+00 : f32
    %35 = vector.broadcast %cst_17 : f32 to vector<16x512xf32>
    %36 = arith.addf %35, %34 : vector<16x512xf32>
    %37 = arith.mulf %26, %36 : vector<16x512xf32>
    %38 = arith.truncf %37 : vector<16x512xf32> to vector<16x512xbf16>
    %c0_18 = arith.constant 0 : index
    %c0_19 = arith.constant 0 : index
    %39 = vector.load %arg6[%c0_18, %c0_19] : memref<512x256xbf16, #tpu.memory_space<vmem>>, vector<512x256xbf16>
    %cst_20 = arith.constant dense<0.000000e+00> : vector<16x256xf32>
    %40 = tpu.matmul %38, %39, %cst_20 {dimension_numbers = #tpu.dot_dimension_numbers<[1], [0], [0], [1], [0, 0, 1, 1], [], []>} : vector<16x512xbf16>, vector<512x256xbf16>, vector<16x256xf32> -> vector<16x256xf32>
    %c0_21 = arith.constant 0 : index
    %c0_22 = arith.constant 0 : index
    %41 = vector.load %arg7[%c0_21, %c0_22] : memref<1x256xf32, #tpu.memory_space<vmem>>, vector<1x256xf32>
    %42 = vector.broadcast %41 : vector<1x256xf32> to vector<16x256xf32>
    %43 = arith.addf %40, %42 : vector<16x256xf32>
    %cst_23 = arith.constant 5.000000e-01 : f32
    %44 = vector.broadcast %cst_23 : f32 to vector<16x256xf32>
    %45 = arith.mulf %44, %43 : vector<16x256xf32>
    %cst_24 = arith.constant 4.471500e-02 : f32
    %46 = vector.broadcast %cst_24 : f32 to vector<16x256xf32>
    %47 = arith.mulf %46, %43 : vector<16x256xf32>
    %48 = arith.mulf %47, %43 : vector<16x256xf32>
    %49 = arith.mulf %48, %43 : vector<16x256xf32>
    %50 = arith.addf %43, %49 : vector<16x256xf32>
    %cst_25 = arith.constant 0.797884583 : f32
    %51 = vector.broadcast %cst_25 : f32 to vector<16x256xf32>
    %52 = arith.mulf %51, %50 : vector<16x256xf32>
    %53 = math.tanh %52 : vector<16x256xf32>
    %cst_26 = arith.constant 1.000000e+00 : f32
    %54 = vector.broadcast %cst_26 : f32 to vector<16x256xf32>
    %55 = arith.addf %54, %53 : vector<16x256xf32>
    %56 = arith.mulf %45, %55 : vector<16x256xf32>
    %57 = arith.truncf %56 : vector<16x256xf32> to vector<16x256xbf16>
    %c0_27 = arith.constant 0 : index
    %c0_28 = arith.constant 0 : index
    %58 = vector.load %arg8[%c0_27, %c0_28] : memref<256x128xbf16, #tpu.memory_space<vmem>>, vector<256x128xbf16>
    %cst_29 = arith.constant dense<0.000000e+00> : vector<16x128xf32>
    %59 = tpu.matmul %57, %58, %cst_29 {dimension_numbers = #tpu.dot_dimension_numbers<[1], [0], [0], [1], [0, 0, 1, 1], [], []>} : vector<16x256xbf16>, vector<256x128xbf16>, vector<16x128xf32> -> vector<16x128xf32>
    %c0_30 = arith.constant 0 : index
    %c0_31 = arith.constant 0 : index
    %60 = vector.load %arg9[%c0_30, %c0_31] : memref<1x128xf32, #tpu.memory_space<vmem>>, vector<1x128xf32>
    %61 = vector.broadcast %60 : vector<1x128xf32> to vector<16x128xf32>
    %62 = arith.addf %59, %61 : vector<16x128xf32>
    %cst_32 = arith.constant 5.000000e-01 : f32
    %63 = vector.broadcast %cst_32 : f32 to vector<16x128xf32>
    %64 = arith.mulf %63, %62 : vector<16x128xf32>
    %cst_33 = arith.constant 4.471500e-02 : f32
    %65 = vector.broadcast %cst_33 : f32 to vector<16x128xf32>
    %66 = arith.mulf %65, %62 : vector<16x128xf32>
    %67 = arith.mulf %66, %62 : vector<16x128xf32>
    %68 = arith.mulf %67, %62 : vector<16x128xf32>
    %69 = arith.addf %62, %68 : vector<16x128xf32>
    %cst_34 = arith.constant 0.797884583 : f32
    %70 = vector.broadcast %cst_34 : f32 to vector<16x128xf32>
    %71 = arith.mulf %70, %69 : vector<16x128xf32>
    %72 = math.tanh %71 : vector<16x128xf32>
    %cst_35 = arith.constant 1.000000e+00 : f32
    %73 = vector.broadcast %cst_35 : f32 to vector<16x128xf32>
    %74 = arith.addf %73, %72 : vector<16x128xf32>
    %75 = arith.mulf %64, %74 : vector<16x128xf32>
    %76 = arith.truncf %75 : vector<16x128xf32> to vector<16x128xbf16>
    %c0_36 = arith.constant 0 : index
    %c0_37 = arith.constant 0 : index
    %77 = vector.load %arg10[%c0_36, %c0_37] : memref<128x128xbf16, #tpu.memory_space<vmem>>, vector<128x128xbf16>
    %cst_38 = arith.constant dense<0.000000e+00> : vector<16x128xf32>
    %78 = tpu.matmul %76, %77, %cst_38 {dimension_numbers = #tpu.dot_dimension_numbers<[1], [0], [0], [1], [0, 0, 1, 1], [], []>} : vector<16x128xbf16>, vector<128x128xbf16>, vector<16x128xf32> -> vector<16x128xf32>
    %c0_39 = arith.constant 0 : index
    %c0_40 = arith.constant 0 : index
    %79 = vector.load %arg11[%c0_39, %c0_40] : memref<1x128xf32, #tpu.memory_space<vmem>>, vector<1x128xf32>
    %80 = vector.broadcast %79 : vector<1x128xf32> to vector<16x128xf32>
    %81 = arith.addf %78, %80 : vector<16x128xf32>
    %c0_41 = arith.constant 0 : index
    %c0_42 = arith.constant 0 : index
    %82 = vector.load %arg12[%c0_41, %c0_42] : memref<16x128xf32, #tpu.memory_space<vmem>>, vector<16x128xf32>
    tpu.vector_store %arg12[%c0_41, %c0_42], %81 {strides = array<i32>} : memref<16x128xf32, #tpu.memory_space<vmem>>, vector<16x128xf32>,
    return
  }
  func.func @transform_0(%arg0: i32) -> (i32, i32) {
    %c0_i32 = arith.constant 0 : i32
    %c0_i32_0 = arith.constant 0 : i32
    return %arg0, %c0_i32 : i32, i32
  }
  func.func @transform_1(%arg0: i32) -> (i32, i32) {
    %c0_i32 = arith.constant 0 : i32
    %c0_i32_0 = arith.constant 0 : i32
    %c0_i32_1 = arith.constant 0 : i32
    return %c0_i32, %c0_i32_0 : i32, i32
  }
  func.func @transform_2(%arg0: i32) -> (i32, i32) {
    %c0_i32 = arith.constant 0 : i32
    %c0_i32_0 = arith.constant 0 : i32
    %c0_i32_1 = arith.constant 0 : i32
    return %c0_i32, %c0_i32_0 : i32, i32
  }
  func.func @transform_3(%arg0: i32) -> (i32, i32) {
    %c0_i32 = arith.constant 0 : i32
    %c0_i32_0 = arith.constant 0 : i32
    %c0_i32_1 = arith.constant 0 : i32
    return %c0_i32, %c0_i32_0 : i32, i32
  }
  func.func @transform_4(%arg0: i32) -> (i32, i32) {
    %c0_i32 = arith.constant 0 : i32
    %c0_i32_0 = arith.constant 0 : i32
    %c0_i32_1 = arith.constant 0 : i32
    return %c0_i32, %c0_i32_0 : i32, i32
  }
  func.func @transform_5(%arg0: i32) -> (i32, i32) {
    %c0_i32 = arith.constant 0 : i32
    %c0_i32_0 = arith.constant 0 : i32
    %c0_i32_1 = arith.constant 0 : i32
    return %c0_i32, %c0_i32_0 : i32, i32
  }
  func.func @transform_6(%arg0: i32) -> (i32, i32) {
    %c0_i32 = arith.constant 0 : i32
    %c0_i32_0 = arith.constant 0 : i32
    %c0_i32_1 = arith.constant 0 : i32
    return %c0_i32, %c0_i32_0 : i32, i32
  }
  func.func @transform_7(%arg0: i32) -> (i32, i32) {
    %c0_i32 = arith.constant 0 : i32
    %c0_i32_0 = arith.constant 0 : i32
    %c0_i32_1 = arith.constant 0 : i32
    return %c0_i32, %c0_i32_0 : i32, i32
  }
  func.func @transform_8(%arg0: i32) -> (i32, i32) {
    %c0_i32 = arith.constant 0 : i32
    %c0_i32_0 = arith.constant 0 : i32
    %c0_i32_1 = arith.constant 0 : i32
    return %c0_i32, %c0_i32_0 : i32, i32
  }
  func.func @transform_9(%arg0: i32) -> (i32, i32) {
    %c0_i32 = arith.constant 0 : i32
    %c0_i32_0 = arith.constant 0 : i32
    %c0_i32_1 = arith.constant 0 : i32
    return %c0_i32, %c0_i32_0 : i32, i32
  }
  func.func @transform_10(%arg0: i32) -> (i32, i32) {
    %c0_i32 = arith.constant 0 : i32
    %c0_i32_0 = arith.constant 0 : i32
    %c0_i32_1 = arith.constant 0 : i32
    return %c0_i32, %c0_i32_0 : i32, i32
  }
  func.func @transform_11(%arg0: i32) -> (i32, i32) {
    %c0_i32 = arith.constant 0 : i32
    %c0_i32_0 = arith.constant 0 : i32
    return %arg0, %c0_i32 : i32, i32
  }
}

</mosaic_0001>

<llo_original>
// kernel: tpu_custom_call.1
$region0: #{tpu_custom_call.1}
  #allocation0 [shape = 'u32[]', space=smem, size = 0x4, offset = 0x4, fixed_abs, tag = 'smem constant byte address 0x4 - core index']
  #allocation1 [shape = 'u32[144,128]{1,0:T(1,128)}', space=vmem, size = 0x12000, scoped, tag = 'internal scratch']
  %s0 = inlined_call_operand.hbm [shape: bf16[16,256], index: 0, kind: input, shape index: {}]
  %s1 = inlined_call_operand.hbm [shape: bf16[256,512], index: 1, kind: input, shape index: {}]
  %s2 = inlined_call_operand.vmem [shape: f32[1,512], index: 2, kind: input, shape index: {}]
  %s3 = inlined_call_operand.hbm [shape: bf16[512,512], index: 3, kind: input, shape index: {}]
  %s4 = inlined_call_operand.vmem [shape: f32[1,512], index: 4, kind: input, shape index: {}]
  %s5 = inlined_call_operand.hbm [shape: bf16[512,256], index: 5, kind: input, shape index: {}]
  %s6 = inlined_call_operand.vmem [shape: f32[1,256], index: 6, kind: input, shape index: {}]
  %s7 = inlined_call_operand.hbm [shape: bf16[256,128], index: 7, kind: input, shape index: {}]
  %s8 = inlined_call_operand.vmem [shape: f32[1,128], index: 8, kind: input, shape index: {}]
  %s9 = inlined_call_operand.hbm [shape: bf16[128,128], index: 9, kind: input, shape index: {}]
  %s10 = inlined_call_operand.vmem [shape: f32[1,128], index: 10, kind: input, shape index: {}]
  %s11 = inlined_call_operand.hbm [shape: f32[16,128], index: 11, kind: output, shape index: {}]
  %s12 = sld [smem:[#allocation0]]
  $region78: #{tpu_custom_call.1} parent=0
    _
  %s14 = ssub.s32 1, %s12
  %s15 = scalar_select 0, %s14, %s12
  $region1: #{tpu_custom_call.1} parent=0
    #allocation2 [shape = 'u8[8192]{0}', space=vmem, size = 0x2000, scoped, tag = 'input window, operand 0, single buffered']
    #allocation3 [shape = 's32[1]{0}', space=sflag, size = 0x4, scoped, tag = 'scoped memory for tpu_custom_call.1']
    #allocation4 [shape = 's32[1]{0}', space=sflag, size = 0x4, scoped, tag = 'scoped memory for tpu_custom_call.1']
    #allocation5 [shape = 'u8[262144]{0}', space=vmem, size = 0x40000, scoped, tag = 'input window, operand 1, single buffered']
    #allocation6 [shape = 's32[1]{0}', space=sflag, size = 0x4, scoped, tag = 'scoped memory for tpu_custom_call.1']
    #allocation7 [shape = 'u8[524288]{0}', space=vmem, size = 0x80000, scoped, tag = 'input window, operand 3, single buffered']
    #allocation8 [shape = 'u8[262144]{0}', space=vmem, size = 0x40000, scoped, tag = 'input window, operand 5, single buffered']
    #allocation9 [shape = 's32[1]{0}', space=sflag, size = 0x4, scoped, tag = 'scoped memory for tpu_custom_call.1']
    #allocation10 [shape = 'u8[65536]{0}', space=vmem, size = 0x10000, scoped, tag = 'input window, operand 7, single buffered']
    #allocation11 [shape = 'u8[32768]{0}', space=vmem, size = 0x8000, scoped, tag = 'input window, operand 9, single buffered']
    #allocation12 [shape = 's32[1]{0}', space=sflag, size = 0x4, scoped, tag = 'scoped memory for tpu_custom_call.1']
    #allocation13 [shape = 'u8[8192]{0}', space=vmem, size = 0x2000, scoped, tag = 'output window, operand 0, single buffered']
    %16 = vsyncpa [#allocation3], 0
    %17 = vsyncpa [#allocation6], 0
    %18 = vsyncpa [#allocation9], 0
    %19 = vsyncpa [#allocation12], 0
    %20 = vsyncpa [#allocation4], 0
    // Predicated region
    $region2: #{tpu_custom_call.1} parent=1 // pred_check
      _
    $region3: #{tpu_custom_call.1} parent=1 // pred_check_branch
      %22 = sbr.rel (0) target = $region5
    $region4: #{tpu_custom_call.1} parent=1 // pred_region
      %s24 = ssub.s32 256, 256
      %25 = vsyncadd [#allocation3], %s24
      %s26 = sshll.u32 [#allocation2], 4
      %s27 = int_to_ptr.vmem [resolvable:$true] %s26
      %32 = dma.hbm_to_vmem [thread:$0]  %s0, 256, %s27, [#allocation3], 128, 128, 8
    $region5: #{tpu_custom_call.1} parent=1 // pred_fallthru
      _
    // Predicated region
    $region6: #{tpu_custom_call.1} parent=1 // pred_check
      _
    $region7: #{tpu_custom_call.1} parent=1 // pred_check_branch
      %34 = sbr.rel (0) target = $region9
    $region8: #{tpu_custom_call.1} parent=1 // pred_region
      %s36 = ssub.s32 8192, 8192
      %37 = vsyncadd [#allocation6], %s36
      %s38 = sshll.u32 [#allocation5], 4
      %s39 = int_to_ptr.vmem [resolvable:$true] %s38
      %44 = dma.hbm_to_vmem [thread:$0]  %s1, 8192, %s39, [#allocation6], 256, 256, 16
    $region9: #{tpu_custom_call.1} parent=1 // pred_fallthru
      _
    // Predicated region
    $region10: #{tpu_custom_call.1} parent=1 // pred_check
      _
    $region11: #{tpu_custom_call.1} parent=1 // pred_check_branch
      %46 = sbr.rel (0) target = $region13
    $region12: #{tpu_custom_call.1} parent=1 // pred_region
      _
    $region13: #{tpu_custom_call.1} parent=1 // pred_fallthru
      _
    // Predicated region
    $region14: #{tpu_custom_call.1} parent=1 // pred_check
      _
    $region15: #{tpu_custom_call.1} parent=1 // pred_check_branch
      %48 = sbr.rel (0) target = $region17
    $region16: #{tpu_custom_call.1} parent=1 // pred_region
      %s50 = ssub.s32 16384, 16384
      %51 = vsyncadd [#allocation6], %s50
      %s52 = sshll.u32 [#allocation7], 4
      %s53 = int_to_ptr.vmem [resolvable:$true] %s52
      %58 = dma.hbm_to_vmem [thread:$0]  %s3, 16384, %s53, [#allocation6], 256, 256, 16
    $region17: #{tpu_custom_call.1} parent=1 // pred_fallthru
      _
    // Predicated region
    $region18: #{tpu_custom_call.1} parent=1 // pred_check
      _
    $region19: #{tpu_custom_call.1} parent=1 // pred_check_branch
      %60 = sbr.rel (0) target = $region21
    $region20: #{tpu_custom_call.1} parent=1 // pred_region
      _
    $region21: #{tpu_custom_call.1} parent=1 // pred_fallthru
      _
    // Predicated region
    $region22: #{tpu_custom_call.1} parent=1 // pred_check
      _
    $region23: #{tpu_custom_call.1} parent=1 // pred_check_branch
      %62 = sbr.rel (0) target = $region25
    $region24: #{tpu_custom_call.1} parent=1 // pred_region
      %s64 = ssub.s32 8192, 8192
      %65 = vsyncadd [#allocation9], %s64
      %s66 = sshll.u32 [#allocation8], 4
      %s67 = int_to_ptr.vmem [resolvable:$true] %s66
      %72 = dma.hbm_to_vmem [thread:$0]  %s5, 8192, %s67, [#allocation9], 128, 128, 8
    $region25: #{tpu_custom_call.1} parent=1 // pred_fallthru
      _
    // Predicated region
    $region26: #{tpu_custom_call.1} parent=1 // pred_check
      _
    $region27: #{tpu_custom_call.1} parent=1 // pred_check_branch
      %74 = sbr.rel (0) target = $region29
    $region28: #{tpu_custom_call.1} parent=1 // pred_region
      _
    $region29: #{tpu_custom_call.1} parent=1 // pred_fallthru
      _
    // Predicated region
    $region30: #{tpu_custom_call.1} parent=1 // pred_check
      _
    $region31: #{tpu_custom_call.1} parent=1 // pred_check_branch
      %76 = sbr.rel (0) target = $region33
    $region32: #{tpu_custom_call.1} parent=1 // pred_region
      %s78 = ssub.s32 2048, 2048
      %79 = vsyncadd [#allocation9], %s78
      %s80 = sshll.u32 [#allocation10], 4
      %s81 = int_to_ptr.vmem [resolvable:$true] %s80
      %86 = dma.hbm_to_vmem [thread:$0]  %s7, 2048, %s81, [#allocation9], 64, 64, 4
    $region33: #{tpu_custom_call.1} parent=1 // pred_fallthru
      _
    // Predicated region
    $region34: #{tpu_custom_call.1} parent=1 // pred_check
      _
    $region35: #{tpu_custom_call.1} parent=1 // pred_check_branch
      %88 = sbr.rel (0) target = $region37
    $region36: #{tpu_custom_call.1} parent=1 // pred_region
      _
    $region37: #{tpu_custom_call.1} parent=1 // pred_fallthru
      _
    // Predicated region
    $region38: #{tpu_custom_call.1} parent=1 // pred_check
      _
    $region39: #{tpu_custom_call.1} parent=1 // pred_check_branch
      %90 = sbr.rel (0) target = $region41
    $region40: #{tpu_custom_call.1} parent=1 // pred_region
      %s92 = ssub.s32 1024, 1024
      %93 = vsyncadd [#allocation12], %s92
      %s94 = sshll.u32 [#allocation11], 4
      %s95 = int_to_ptr.vmem [resolvable:$true] %s94
      %100 = dma.hbm_to_vmem [thread:$0]  %s9, 1024, %s95, [#allocation12], 64, 64, 4
    $region41: #{tpu_custom_call.1} parent=1 // pred_fallthru
      _
    // Predicated region
    $region42: #{tpu_custom_call.1} parent=1 // pred_check
      _
    $region43: #{tpu_custom_call.1} parent=1 // pred_check_branch
      %102 = sbr.rel (0) target = $region45
    $region44: #{tpu_custom_call.1} parent=1 // pred_region
      _
    $region45: #{tpu_custom_call.1} parent=1 // pred_fallthru
      _
    // Predicated region
    $region46: #{tpu_custom_call.1} parent=1 // pred_check
      _
    $region47: #{tpu_custom_call.1} parent=1 // pred_check_branch
      %104 = sbr.rel (0) target = $region49
    $region48: #{tpu_custom_call.1} parent=1 // pred_region
      %105 = dma.done [#allocation3], 256
    $region49: #{tpu_custom_call.1} parent=1 // pred_fallthru
      _
    // Predicated region
    $region50: #{tpu_custom_call.1} parent=1 // pred_check
      _
    $region51: #{tpu_custom_call.1} parent=1 // pred_check_branch
      %107 = sbr.rel (0) target = $region53
    $region52: #{tpu_custom_call.1} parent=1 // pred_region
      %108 = dma.done [#allocation6], 8192
    $region53: #{tpu_custom_call.1} parent=1 // pred_fallthru
      _
    // Predicated region
    $region54: #{tpu_custom_call.1} parent=1 // pred_check
      _
    $region55: #{tpu_custom_call.1} parent=1 // pred_check_branch
      %110 = sbr.rel (0) target = $region57
    $region56: #{tpu_custom_call.1} parent=1 // pred_region
      %111 = dma.done [#allocation6], 16384
    $region57: #{tpu_custom_call.1} parent=1 // pred_fallthru
      _
    // Predicated region
    $region58: #{tpu_custom_call.1} parent=1 // pred_check
      _
    $region59: #{tpu_custom_call.1} parent=1 // pred_check_branch
      %113 = sbr.rel (0) target = $region61
    $region60: #{tpu_custom_call.1} parent=1 // pred_region
      %114 = dma.done [#allocation9], 8192
    $region61: #{tpu_custom_call.1} parent=1 // pred_fallthru
      _
    // Predicated region
    $region62: #{tpu_custom_call.1} parent=1 // pred_check
      _
    $region63: #{tpu_custom_call.1} parent=1 // pred_check_branch
      %116 = sbr.rel (0) target = $region65
    $region64: #{tpu_custom_call.1} parent=1 // pred_region
      %117 = dma.done [#allocation9], 2048
    $region65: #{tpu_custom_call.1} parent=1 // pred_fallthru
      _
    // Predicated region
    $region66: #{tpu_custom_call.1} parent=1 // pred_check
      _
    $region67: #{tpu_custom_call.1} parent=1 // pred_check_branch
      %119 = sbr.rel (0) target = $region69
    $region68: #{tpu_custom_call.1} parent=1 // pred_region
      %120 = dma.done [#allocation12], 1024
    $region69: #{tpu_custom_call.1} parent=1 // pred_fallthru
      _
    %v122 = vld [vmem:[#allocation2] sm:$0xff]
    %v123 = vld [vmem:[#allocation2 + $0x8] sm:$0xff]
    %v124 = vld [vmem:[#allocation5] sm:$0xff]
    %v125 = vld [vmem:[#allocation5 + $0x8] sm:$0xff]
    %v126 = vld [vmem:[#allocation5 + $0x10] sm:$0xff]
    %v127 = vld [vmem:[#allocation5 + $0x18] sm:$0xff]
    %v128 = vld [vmem:[#allocation5 + $0x20] sm:$0xff]
    %v129 = vld [vmem:[#allocation5 + $0x28] sm:$0xff]
    %v130 = vld [vmem:[#allocation5 + $0x30] sm:$0xff]
    %v131 = vld [vmem:[#allocation5 + $0x38] sm:$0xff]
    %v132 = vld [vmem:[#allocation5 + $0x40] sm:$0xff]
    %v133 = vld [vmem:[#allocation5 + $0x48] sm:$0xff]
    %v134 = vld [vmem:[#allocation5 + $0x50] sm:$0xff]
    %v135 = vld [vmem:[#allocation5 + $0x58] sm:$0xff]
    %v136 = vld [vmem:[#allocation5 + $0x60] sm:$0xff]
    %v137 = vld [vmem:[#allocation5 + $0x68] sm:$0xff]
    %v138 = vld [vmem:[#allocation5 + $0x70] sm:$0xff]
    %v139 = vld [vmem:[#allocation5 + $0x78] sm:$0xff]
    %v140 = vld [vmem:[#allocation5 + $0x80] sm:$0xff]
    %v141 = vld [vmem:[#allocation5 + $0x88] sm:$0xff]
    %v142 = vld [vmem:[#allocation5 + $0x90] sm:$0xff]
    %v143 = vld [vmem:[#allocation5 + $0x98] sm:$0xff]
    %v144 = vld [vmem:[#allocation5 + $0xa0] sm:$0xff]
    %v145 = vld [vmem:[#allocation5 + $0xa8] sm:$0xff]
    %v146 = vld [vmem:[#allocation5 + $0xb0] sm:$0xff]
    %v147 = vld [vmem:[#allocation5 + $0xb8] sm:$0xff]
    %v148 = vld [vmem:[#allocation5 + $0xc0] sm:$0xff]
    %v149 = vld [vmem:[#allocation5 + $0xc8] sm:$0xff]
    %v150 = vld [vmem:[#allocation5 + $0xd0] sm:$0xff]
    %v151 = vld [vmem:[#allocation5 + $0xd8] sm:$0xff]
    %v152 = vld [vmem:[#allocation5 + $0xe0] sm:$0xff]
    %v153 = vld [vmem:[#allocation5 + $0xe8] sm:$0xff]
    %v154 = vld [vmem:[#allocation5 + $0xf0] sm:$0xff]
    %v155 = vld [vmem:[#allocation5 + $0xf8] sm:$0xff]
    %v156 = vld [vmem:[#allocation5 + $0x100] sm:$0xff]
    %v157 = vld [vmem:[#allocation5 + $0x108] sm:$0xff]
    %v158 = vld [vmem:[#allocation5 + $0x110] sm:$0xff]
    %v159 = vld [vmem:[#allocation5 + $0x118] sm:$0xff]
    %v160 = vld [vmem:[#allocation5 + $0x120] sm:$0xff]
    %v161 = vld [vmem:[#allocation5 + $0x128] sm:$0xff]
    %v162 = vld [vmem:[#allocation5 + $0x130] sm:$0xff]
    %v163 = vld [vmem:[#allocation5 + $0x138] sm:$0xff]
    %v164 = vld [vmem:[#allocation5 + $0x140] sm:$0xff]
    %v165 = vld [vmem:[#allocation5 + $0x148] sm:$0xff]
    %v166 = vld [vmem:[#allocation5 + $0x150] sm:$0xff]
    %v167 = vld [vmem:[#allocation5 + $0x158] sm:$0xff]
    %v168 = vld [vmem:[#allocation5 + $0x160] sm:$0xff]
    %v169 = vld [vmem:[#allocation5 + $0x168] sm:$0xff]
    %v170 = vld [vmem:[#allocation5 + $0x170] sm:$0xff]
    %v171 = vld [vmem:[#allocation5 + $0x178] sm:$0xff]
    %v172 = vld [vmem:[#allocation5 + $0x180] sm:$0xff]
    %v173 = vld [vmem:[#allocation5 + $0x188] sm:$0xff]
    %v174 = vld [vmem:[#allocation5 + $0x190] sm:$0xff]
    %v175 = vld [vmem:[#allocation5 + $0x198] sm:$0xff]
    %v176 = vld [vmem:[#allocation5 + $0x1a0] sm:$0xff]
    %v177 = vld [vmem:[#allocation5 + $0x1a8] sm:$0xff]
    %v178 = vld [vmem:[#allocation5 + $0x1b0] sm:$0xff]
    %v179 = vld [vmem:[#allocation5 + $0x1b8] sm:$0xff]
    %v180 = vld [vmem:[#allocation5 + $0x1c0] sm:$0xff]
    %v181 = vld [vmem:[#allocation5 + $0x1c8] sm:$0xff]
    %v182 = vld [vmem:[#allocation5 + $0x1d0] sm:$0xff]
    %v183 = vld [vmem:[#allocation5 + $0x1d8] sm:$0xff]
    %v184 = vld [vmem:[#allocation5 + $0x1e0] sm:$0xff]
    %v185 = vld [vmem:[#allocation5 + $0x1e8] sm:$0xff]
    %v186 = vld [vmem:[#allocation5 + $0x1f0] sm:$0xff]
    %v187 = vld [vmem:[#allocation5 + $0x1f8] sm:$0xff]
    %v188 = vld [vmem:[%s2] sm:$0xf]
    %v190 = vlaneseq
    %v191 = vshrl.u32 %v190, 7
    %v192 = vsub.s32 0, %v191
    %v193 = vrot.slane %v188, %v192
    %v194 = vlaneseq
    %v195 = vshrl.u32 %v194, 7
    %v196 = vsub.s32 1, %v195
    %v197 = vrot.slane %v188, %v196
    %v198 = vlaneseq
    %v199 = vshrl.u32 %v198, 7
    %v200 = vsub.s32 2, %v199
    %v201 = vrot.slane %v188, %v200
    %v202 = vlaneseq
    %v203 = vshrl.u32 %v202, 7
    %v204 = vsub.s32 3, %v203
    %v205 = vrot.slane %v188, %v204
    %v212 = vunpack.c.l.b16 %v122
    %v213 = vunpack.c.h.b16 %v122
    %v214 = vunpack.c.l.b16 %v123
    %v215 = vunpack.c.h.b16 %v123
    %v216 = vpack.c.b16 %v214, %v212
    %v217 = vpack.c.b16 %v215, %v213
    %v284 = vunpack.c.l.b16 %v124
    %v285 = vunpack.c.h.b16 %v124
    %v286 = vunpack.c.l.b16 %v125
    %v287 = vunpack.c.h.b16 %v125
    %v288 = vunpack.c.l.b16 %v126
    %v289 = vunpack.c.h.b16 %v126
    %v290 = vunpack.c.l.b16 %v127
    %v291 = vunpack.c.h.b16 %v127
    %v292 = vunpack.c.l.b16 %v128
    %v293 = vunpack.c.h.b16 %v128
    %v294 = vunpack.c.l.b16 %v129
    %v295 = vunpack.c.h.b16 %v129
    %v296 = vunpack.c.l.b16 %v130
    %v297 = vunpack.c.h.b16 %v130
    %v298 = vunpack.c.l.b16 %v131
    %v299 = vunpack.c.h.b16 %v131
    %v300 = vunpack.c.l.b16 %v132
    %v301 = vunpack.c.h.b16 %v132
    %v302 = vunpack.c.l.b16 %v133
    %v303 = vunpack.c.h.b16 %v133
    %v304 = vunpack.c.l.b16 %v134
    %v305 = vunpack.c.h.b16 %v134
    %v306 = vunpack.c.l.b16 %v135
    %v307 = vunpack.c.h.b16 %v135
    %v308 = vunpack.c.l.b16 %v136
    %v309 = vunpack.c.h.b16 %v136
    %v310 = vunpack.c.l.b16 %v137
    %v311 = vunpack.c.h.b16 %v137
    %v312 = vunpack.c.l.b16 %v138
    %v313 = vunpack.c.h.b16 %v138
    %v314 = vunpack.c.l.b16 %v139
    %v315 = vunpack.c.h.b16 %v139
    %v316 = vunpack.c.l.b16 %v140
    %v317 = vunpack.c.h.b16 %v140
    %v318 = vunpack.c.l.b16 %v141
    %v319 = vunpack.c.h.b16 %v141
    %v320 = vunpack.c.l.b16 %v142
    %v321 = vunpack.c.h.b16 %v142
    %v322 = vunpack.c.l.b16 %v143
    %v323 = vunpack.c.h.b16 %v143
    %v324 = vunpack.c.l.b16 %v144
    %v325 = vunpack.c.h.b16 %v144
    %v326 = vunpack.c.l.b16 %v145
    %v327 = vunpack.c.h.b16 %v145
    %v328 = vunpack.c.l.b16 %v146
    %v329 = vunpack.c.h.b16 %v146
    %v330 = vunpack.c.l.b16 %v147
    %v331 = vunpack.c.h.b16 %v147
    %v332 = vunpack.c.l.b16 %v148
    %v333 = vunpack.c.h.b16 %v148
    %v334 = vunpack.c.l.b16 %v149
    %v335 = vunpack.c.h.b16 %v149
    %v336 = vunpack.c.l.b16 %v150
    %v337 = vunpack.c.h.b16 %v150
    %v338 = vunpack.c.l.b16 %v151
    %v339 = vunpack.c.h.b16 %v151
    %v340 = vunpack.c.l.b16 %v152
    %v341 = vunpack.c.h.b16 %v152
    %v342 = vunpack.c.l.b16 %v153
    %v343 = vunpack.c.h.b16 %v153
    %v344 = vunpack.c.l.b16 %v154
    %v345 = vunpack.c.h.b16 %v154
    %v346 = vunpack.c.l.b16 %v155
    %v347 = vunpack.c.h.b16 %v155
    %v348 = vunpack.c.l.b16 %v156
    %v349 = vunpack.c.h.b16 %v156
    %v350 = vunpack.c.l.b16 %v157
    %v351 = vunpack.c.h.b16 %v157
    %v352 = vunpack.c.l.b16 %v158
    %v353 = vunpack.c.h.b16 %v158
    %v354 = vunpack.c.l.b16 %v159
    %v355 = vunpack.c.h.b16 %v159
    %v356 = vunpack.c.l.b16 %v160
    %v357 = vunpack.c.h.b16 %v160
    %v358 = vunpack.c.l.b16 %v161
    %v359 = vunpack.c.h.b16 %v161
    %v360 = vunpack.c.l.b16 %v162
    %v361 = vunpack.c.h.b16 %v162
    %v362 = vunpack.c.l.b16 %v163
    %v363 = vunpack.c.h.b16 %v163
    %v364 = vunpack.c.l.b16 %v164
    %v365 = vunpack.c.h.b16 %v164
    %v366 = vunpack.c.l.b16 %v165
    %v367 = vunpack.c.h.b16 %v165
    %v368 = vunpack.c.l.b16 %v166
    %v369 = vunpack.c.h.b16 %v166
    %v370 = vunpack.c.l.b16 %v167
    %v371 = vunpack.c.h.b16 %v167
    %v372 = vunpack.c.l.b16 %v168
    %v373 = vunpack.c.h.b16 %v168
    %v374 = vunpack.c.l.b16 %v169
    %v375 = vunpack.c.h.b16 %v169
    %v376 = vunpack.c.l.b16 %v170
    %v377 = vunpack.c.h.b16 %v170
    %v378 = vunpack.c.l.b16 %v171
    %v379 = vunpack.c.h.b16 %v171
    %v380 = vunpack.c.l.b16 %v172
    %v381 = vunpack.c.h.b16 %v172
    %v382 = vunpack.c.l.b16 %v173
    %v383 = vunpack.c.h.b16 %v173
    %v384 = vunpack.c.l.b16 %v174
    %v385 = vunpack.c.h.b16 %v174
    %v386 = vunpack.c.l.b16 %v175
    %v387 = vunpack.c.h.b16 %v175
    %v388 = vunpack.c.l.b16 %v176
    %v389 = vunpack.c.h.b16 %v176
    %v390 = vunpack.c.l.b16 %v177
    %v391 = vunpack.c.h.b16 %v177
    %v392 = vunpack.c.l.b16 %v178
    %v393 = vunpack.c.h.b16 %v178
    %v394 = vunpack.c.l.b16 %v179
    %v395 = vunpack.c.h.b16 %v179
    %v396 = vunpack.c.l.b16 %v180
    %v397 = vunpack.c.h.b16 %v180
    %v398 = vunpack.c.l.b16 %v181
    %v399 = vunpack.c.h.b16 %v181
    %v400 = vunpack.c.l.b16 %v182
    %v401 = vunpack.c.h.b16 %v182
    %v402 = vunpack.c.l.b16 %v183
    %v403 = vunpack.c.h.b16 %v183
    %v404 = vunpack.c.l.b16 %v184
    %v405 = vunpack.c.h.b16 %v184
    %v406 = vunpack.c.l.b16 %v185
    %v407 = vunpack.c.h.b16 %v185
    %v408 = vunpack.c.l.b16 %v186
    %v409 = vunpack.c.h.b16 %v186
    %v410 = vunpack.c.l.b16 %v187
    %v411 = vunpack.c.h.b16 %v187
    %v412 = vpack.c.b16 %v288, %v284
    %v413 = vpack.c.b16 %v289, %v285
    %v414 = vpack.c.b16 %v290, %v286
    %v415 = vpack.c.b16 %v291, %v287
    %v416 = vpack.c.b16 %v296, %v292
    %v417 = vpack.c.b16 %v297, %v293
    %v418 = vpack.c.b16 %v298, %v294
    %v419 = vpack.c.b16 %v299, %v295
    %v420 = vpack.c.b16 %v304, %v300
    %v421 = vpack.c.b16 %v305, %v301
    %v422 = vpack.c.b16 %v306, %v302
    %v423 = vpack.c.b16 %v307, %v303
    %v424 = vpack.c.b16 %v312, %v308
    %v425 = vpack.c.b16 %v313, %v309
    %v426 = vpack.c.b16 %v314, %v310
    %v427 = vpack.c.b16 %v315, %v311
    %v428 = vpack.c.b16 %v320, %v316
    %v429 = vpack.c.b16 %v321, %v317
    %v430 = vpack.c.b16 %v322, %v318
    %v431 = vpack.c.b16 %v323, %v319
    %v432 = vpack.c.b16 %v328, %v324
    %v433 = vpack.c.b16 %v329, %v325
    %v434 = vpack.c.b16 %v330, %v326
    %v435 = vpack.c.b16 %v331, %v327
    %v436 = vpack.c.b16 %v336, %v332
    %v437 = vpack.c.b16 %v337, %v333
    %v438 = vpack.c.b16 %v338, %v334
    %v439 = vpack.c.b16 %v339, %v335
    %v440 = vpack.c.b16 %v344, %v340
    %v441 = vpack.c.b16 %v345, %v341
    %v442 = vpack.c.b16 %v346, %v342
    %v443 = vpack.c.b16 %v347, %v343
    %v444 = vpack.c.b16 %v352, %v348
    %v445 = vpack.c.b16 %v353, %v349
    %v446 = vpack.c.b16 %v354, %v350
    %v447 = vpack.c.b16 %v355, %v351
    %v448 = vpack.c.b16 %v360, %v356
    %v449 = vpack.c.b16 %v361, %v357
    %v450 = vpack.c.b16 %v362, %v358
    %v451 = vpack.c.b16 %v363, %v359
    %v452 = vpack.c.b16 %v368, %v364
    %v453 = vpack.c.b16 %v369, %v365
    %v454 = vpack.c.b16 %v370, %v366
    %v455 = vpack.c.b16 %v371, %v367
    %v456 = vpack.c.b16 %v376, %v372
    %v457 = vpack.c.b16 %v377, %v373
    %v458 = vpack.c.b16 %v378, %v374
    %v459 = vpack.c.b16 %v379, %v375
    %v460 = vpack.c.b16 %v384, %v380
    %v461 = vpack.c.b16 %v385, %v381
    %v462 = vpack.c.b16 %v386, %v382
    %v463 = vpack.c.b16 %v387, %v383
    %v464 = vpack.c.b16 %v392, %v388
    %v465 = vpack.c.b16 %v393, %v389
    %v466 = vpack.c.b16 %v394, %v390
    %v467 = vpack.c.b16 %v395, %v391
    %v468 = vpack.c.b16 %v400, %v396
    %v469 = vpack.c.b16 %v401, %v397
    %v470 = vpack.c.b16 %v402, %v398
    %v471 = vpack.c.b16 %v403, %v399
    %v472 = vpack.c.b16 %v408, %v404
    %v473 = vpack.c.b16 %v409, %v405
    %v474 = vpack.c.b16 %v410, %v406
    %v475 = vpack.c.b16 %v411, %v407
    %540 = vmatprep.subr.bf16.mxu0 %v413
    %541 = vmatpush1.bf16.msra.mxu0 %v412
    %542 = vmatprep.subr.bf16.mxu0 %v417
    %543 = vmatpush1.bf16.msra.mxu0 %v416
    %544 = vmatprep.subr.bf16.mxu0 %v421
    %545 = vmatpush1.bf16.msra.mxu0 %v420
    %546 = vmatprep.subr.bf16.mxu0 %v425
    %547 = vmatpush1.bf16.msra.mxu0 %v424
    %548 = vmatprep.subr.bf16.mxu0 %v429
    %549 = vmatpush1.bf16.msra.mxu0 %v428
    %550 = vmatprep.subr.bf16.mxu0 %v433
    %551 = vmatpush1.bf16.msra.mxu0 %v432
    %552 = vmatprep.subr.bf16.mxu0 %v437
    %553 = vmatpush1.bf16.msra.mxu0 %v436
    %554 = vmatprep.subr.bf16.mxu0 %v441
    %555 = vmatpush1.bf16.msra.mxu0 %v440
    %556 = vmatprep.subr.bf16.mxu0 %v445
    %557 = vmatpush1.bf16.msra.mxu0 %v444
    %558 = vmatprep.subr.bf16.mxu0 %v449
    %559 = vmatpush1.bf16.msra.mxu0 %v448
    %560 = vmatprep.subr.bf16.mxu0 %v453
    %561 = vmatpush1.bf16.msra.mxu0 %v452
    %562 = vmatprep.subr.bf16.mxu0 %v457
    %563 = vmatpush1.bf16.msra.mxu0 %v456
    %564 = vmatprep.subr.bf16.mxu0 %v461
    %565 = vmatpush1.bf16.msra.mxu0 %v460
    %566 = vmatprep.subr.bf16.mxu0 %v465
    %567 = vmatpush1.bf16.msra.mxu0 %v464
    %568 = vmatprep.subr.bf16.mxu0 %v469
    %569 = vmatpush1.bf16.msra.mxu0 %v468
    %570 = vmatprep.subr.bf16.mxu0 %v473
    %571 = vmatpush1.bf16.msra.mxu0 %v472
    %572 = vmatprep.mubr.bf16.mxu0 %v217
    %573 = vmatmul.mubr.bf16.gmra.mrb[0].mxu0 %v216
    %v574 = vpop.f32.mrb[0].mxu0
    %v575 = vadd.f32 %v193, %v574
    %v576 = vpop.f32.mrb[0].mxu0
    %v577 = vadd.f32 %v197, %v576
    %v578 = vpop.f32.mrb[0].mxu0
    %v579 = vadd.f32 %v193, %v578
    %v580 = vpop.f32.mrb[0].mxu0
    %v581 = vadd.f32 %v197, %v580
    %582 = vdwg.mxu0
    %583 = vmatprep.subr.bf16.mxu0 %v415
    %584 = vmatpush1.bf16.msra.mxu0 %v414
    %585 = vmatprep.subr.bf16.mxu0 %v419
    %586 = vmatpush1.bf16.msra.mxu0 %v418
    %587 = vmatprep.subr.bf16.mxu0 %v423
    %588 = vmatpush1.bf16.msra.mxu0 %v422
    %589 = vmatprep.subr.bf16.mxu0 %v427
    %590 = vmatpush1.bf16.msra.mxu0 %v426
    %591 = vmatprep.subr.bf16.mxu0 %v431
    %592 = vmatpush1.bf16.msra.mxu0 %v430
    %593 = vmatprep.subr.bf16.mxu0 %v435
    %594 = vmatpush1.bf16.msra.mxu0 %v434
    %595 = vmatprep.subr.bf16.mxu0 %v439
    %596 = vmatpush1.bf16.msra.mxu0 %v438
    %597 = vmatprep.subr.bf16.mxu0 %v443
    %598 = vmatpush1.bf16.msra.mxu0 %v442
    %599 = vmatprep.subr.bf16.mxu0 %v447
    %600 = vmatpush1.bf16.msra.mxu0 %v446
    %601 = vmatprep.subr.bf16.mxu0 %v451
    %602 = vmatpush1.bf16.msra.mxu0 %v450
    %603 = vmatprep.subr.bf16.mxu0 %v455
    %604 = vmatpush1.bf16.msra.mxu0 %v454
    %605 = vmatprep.subr.bf16.mxu0 %v459
    %606 = vmatpush1.bf16.msra.mxu0 %v458
    %607 = vmatprep.subr.bf16.mxu0 %v463
    %608 = vmatpush1.bf16.msra.mxu0 %v462
    %609 = vmatprep.subr.bf16.mxu0 %v467
    %610 = vmatpush1.bf16.msra.mxu0 %v466
    %611 = vmatprep.subr.bf16.mxu0 %v471
    %612 = vmatpush1.bf16.msra.mxu0 %v470
    %613 = vmatprep.subr.bf16.mxu0 %v475
    %614 = vmatpush1.bf16.msra.mxu0 %v474
    %615 = vmatprep.mubr.bf16.mxu0 %v217
    %616 = vmatmul.mubr.bf16.gmra.mrb[0].mxu0 %v216
    %v617 = vpop.f32.mrb[0].mxu0
    %v618 = vadd.f32 %v201, %v617
    %v619 = vpop.f32.mrb[0].mxu0
    %v620 = vadd.f32 %v205, %v619
    %v621 = vpop.f32.mrb[0].mxu0
    %v622 = vadd.f32 %v201, %v621
    %v623 = vpop.f32.mrb[0].mxu0
    %v624 = vadd.f32 %v205, %v623
    %625 = vdwg.mxu0
    %v626 = vmul.f32 %v575, 0.5
    %v627 = vmul.f32 %v577, 0.5
    %v628 = vmul.f32 %v618, 0.5
    %v629 = vmul.f32 %v620, 0.5
    %v630 = vmul.f32 %v579, 0.5
    %v631 = vmul.f32 %v581, 0.5
    %v632 = vmul.f32 %v622, 0.5
    %v633 = vmul.f32 %v624, 0.5
    %v634 = vmul.f32 %v575, 0.044715
    %v635 = vmul.f32 %v577, 0.044715
    %v636 = vmul.f32 %v618, 0.044715
    %v637 = vmul.f32 %v620, 0.044715
    %v638 = vmul.f32 %v579, 0.044715
    %v639 = vmul.f32 %v581, 0.044715
    %v640 = vmul.f32 %v622, 0.044715
    %v641 = vmul.f32 %v624, 0.044715
    %v642 = vmul.f32 %v634, %v575
    %v643 = vmul.f32 %v635, %v577
    %v644 = vmul.f32 %v636, %v618
    %v645 = vmul.f32 %v637, %v620
    %v646 = vmul.f32 %v638, %v579
    %v647 = vmul.f32 %v639, %v581
    %v648 = vmul.f32 %v640, %v622
    %v649 = vmul.f32 %v641, %v624
    %v650 = vmul.f32 %v642, %v575
    %v651 = vmul.f32 %v643, %v577
    %v652 = vmul.f32 %v644, %v618
    %v653 = vmul.f32 %v645, %v620
    %v654 = vmul.f32 %v646, %v579
    %v655 = vmul.f32 %v647, %v581
    %v656 = vmul.f32 %v648, %v622
    %v657 = vmul.f32 %v649, %v624
    %v658 = vadd.f32 %v575, %v650
    %v659 = vadd.f32 %v577, %v651
    %v660 = vadd.f32 %v618, %v652
    %v661 = vadd.f32 %v620, %v653
    %v662 = vadd.f32 %v579, %v654
    %v663 = vadd.f32 %v581, %v655
    %v664 = vadd.f32 %v622, %v656
    %v665 = vadd.f32 %v624, %v657
    %v666 = vmul.f32 %v658, 0.7978846
    %v667 = vmul.f32 %v659, 0.7978846
    %v668 = vmul.f32 %v660, 0.7978846
    %v669 = vmul.f32 %v661, 0.7978846
    %v670 = vmul.f32 %v662, 0.7978846
    %v671 = vmul.f32 %v663, 0.7978846
    %v672 = vmul.f32 %v664, 0.7978846
    %v673 = vmul.f32 %v665, 0.7978846
    %v674 = vtanh.pop %v666
    %v675 = vtanh.pop %v667
    %v676 = vtanh.pop %v668
    %v677 = vtanh.pop %v669
    %v678 = vtanh.pop %v670
    %v679 = vtanh.pop %v671
    %v680 = vtanh.pop %v672
    %v681 = vtanh.pop %v673
    %v682 = vadd.f32 %v674, 1.0
    %v683 = vadd.f32 %v675, 1.0
    %v684 = vadd.f32 %v676, 1.0
    %v685 = vadd.f32 %v677, 1.0
    %v686 = vadd.f32 %v678, 1.0
    %v687 = vadd.f32 %v679, 1.0
    %v688 = vadd.f32 %v680, 1.0
    %v689 = vadd.f32 %v681, 1.0
    %v690 = vmul.f32 %v626, %v682
    %v691 = vmul.f32 %v627, %v683
    %v692 = vmul.f32 %v628, %v684
    %v693 = vmul.f32 %v629, %v685
    %v694 = vmul.f32 %v630, %v686
    %v695 = vmul.f32 %v631, %v687
    %v696 = vmul.f32 %v632, %v688
    %v697 = vmul.f32 %v633, %v689
    %v698 = vpack.c.bf16 %v694, %v690
    %v699 = vpack.c.bf16 %v695, %v691
    %v700 = vpack.c.bf16 %v696, %v692
    %v701 = vpack.c.bf16 %v697, %v693
    %v702 = vld [vmem:[#allocation7] sm:$0xff]
    %v703 = vld [vmem:[#allocation7 + $0x8] sm:$0xff]
    %v704 = vld [vmem:[#allocation7 + $0x10] sm:$0xff]
    %v705 = vld [vmem:[#allocation7 + $0x18] sm:$0xff]
    %v706 = vld [vmem:[#allocation7 + $0x20] sm:$0xff]
    %v707 = vld [vmem:[#allocation7 + $0x28] sm:$0xff]
    %v708 = vld [vmem:[#allocation7 + $0x30] sm:$0xff]
    %v709 = vld [vmem:[#allocation7 + $0x38] sm:$0xff]
    %v710 = vld [vmem:[#allocation7 + $0x40] sm:$0xff]
    %v711 = vld [vmem:[#allocation7 + $0x48] sm:$0xff]
    %v712 = vld [vmem:[#allocation7 + $0x50] sm:$0xff]
    %v713 = vld [vmem:[#allocation7 + $0x58] sm:$0xff]
    %v714 = vld [vmem:[#allocation7 + $0x60] sm:$0xff]
    %v715 = vld [vmem:[#allocation7 + $0x68] sm:$0xff]
    %v716 = vld [vmem:[#allocation7 + $0x70] sm:$0xff]
    %v717 = vld [vmem:[#allocation7 + $0x78] sm:$0xff]
    %v718 = vld [vmem:[#allocation7 + $0x80] sm:$0xff]
    %v719 = vld [vmem:[#allocation7 + $0x88] sm:$0xff]
    %v720 = vld [vmem:[#allocation7 + $0x90] sm:$0xff]
    %v721 = vld [vmem:[#allocation7 + $0x98] sm:$0xff]
    %v722 = vld [vmem:[#allocation7 + $0xa0] sm:$0xff]
    %v723 = vld [vmem:[#allocation7 + $0xa8] sm:$0xff]
    %v724 = vld [vmem:[#allocation7 + $0xb0] sm:$0xff]
    %v725 = vld [vmem:[#allocation7 + $0xb8] sm:$0xff]
    %v726 = vld [vmem:[#allocation7 + $0xc0] sm:$0xff]
    %v727 = vld [vmem:[#allocation7 + $0xc8] sm:$0xff]
    %v728 = vld [vmem:[#allocation7 + $0xd0] sm:$0xff]
    %v729 = vld [vmem:[#allocation7 + $0xd8] sm:$0xff]
    %v730 = vld [vmem:[#allocation7 + $0xe0] sm:$0xff]
    %v731 = vld [vmem:[#allocation7 + $0xe8] sm:$0xff]
    %v732 = vld [vmem:[#allocation7 + $0xf0] sm:$0xff]
    %v733 = vld [vmem:[#allocation7 + $0xf8] sm:$0xff]
    %v734 = vld [vmem:[#allocation7 + $0x100] sm:$0xff]
    %v735 = vld [vmem:[#allocation7 + $0x108] sm:$0xff]
    %v736 = vld [vmem:[#allocation7 + $0x110] sm:$0xff]
    %v737 = vld [vmem:[#allocation7 + $0x118] sm:$0xff]
    %v738 = vld [vmem:[#allocation7 + $0x120] sm:$0xff]
    %v739 = vld [vmem:[#allocation7 + $0x128] sm:$0xff]
    %v740 = vld [vmem:[#allocation7 + $0x130] sm:$0xff]
    %v741 = vld [vmem:[#allocation7 + $0x138] sm:$0xff]
    %v742 = vld [vmem:[#allocation7 + $0x140] sm:$0xff]
    %v743 = vld [vmem:[#allocation7 + $0x148] sm:$0xff]
    %v744 = vld [vmem:[#allocation7 + $0x150] sm:$0xff]
    %v745 = vld [vmem:[#allocation7 + $0x158] sm:$0xff]
    %v746 = vld [vmem:[#allocation7 + $0x160] sm:$0xff]
    %v747 = vld [vmem:[#allocation7 + $0x168] sm:$0xff]
    %v748 = vld [vmem:[#allocation7 + $0x170] sm:$0xff]
    %v749 = vld [vmem:[#allocation7 + $0x178] sm:$0xff]
    %v750 = vld [vmem:[#allocation7 + $0x180] sm:$0xff]
    %v751 = vld [vmem:[#allocation7 + $0x188] sm:$0xff]
    %v752 = vld [vmem:[#allocation7 + $0x190] sm:$0xff]
    %v753 = vld [vmem:[#allocation7 + $0x198] sm:$0xff]
    %v754 = vld [vmem:[#allocation7 + $0x1a0] sm:$0xff]
    %v755 = vld [vmem:[#allocation7 + $0x1a8] sm:$0xff]
    %v756 = vld [vmem:[#allocation7 + $0x1b0] sm:$0xff]
    %v757 = vld [vmem:[#allocation7 + $0x1b8] sm:$0xff]
    %v758 = vld [vmem:[#allocation7 + $0x1c0] sm:$0xff]
    %v759 = vld [vmem:[#allocation7 + $0x1c8] sm:$0xff]
    %v760 = vld [vmem:[#allocation7 + $0x1d0] sm:$0xff]
    %v761 = vld [vmem:[#allocation7 + $0x1d8] sm:$0xff]
    %v762 = vld [vmem:[#allocation7 + $0x1e0] sm:$0xff]
    %v763 = vld [vmem:[#allocation7 + $0x1e8] sm:$0xff]
    %v764 = vld [vmem:[#allocation7 + $0x1f0] sm:$0xff]
    %v765 = vld [vmem:[#allocation7 + $0x1f8] sm:$0xff]
    %v766 = vld [vmem:[#allocation7 + $0x200] sm:$0xff]
    %v767 = vld [vmem:[#allocation7 + $0x208] sm:$0xff]
    %v768 = vld [vmem:[#allocation7 + $0x210] sm:$0xff]
    %v769 = vld [vmem:[#allocation7 + $0x218] sm:$0xff]
    %v770 = vld [vmem:[#allocation7 + $0x220] sm:$0xff]
    %v771 = vld [vmem:[#allocation7 + $0x228] sm:$0xff]
    %v772 = vld [vmem:[#allocation7 + $0x230] sm:$0xff]
    %v773 = vld [vmem:[#allocation7 + $0x238] sm:$0xff]
    %v774 = vld [vmem:[#allocation7 + $0x240] sm:$0xff]
    %v775 = vld [vmem:[#allocation7 + $0x248] sm:$0xff]
    %v776 = vld [vmem:[#allocation7 + $0x250] sm:$0xff]
    %v777 = vld [vmem:[#allocation7 + $0x258] sm:$0xff]
    %v778 = vld [vmem:[#allocation7 + $0x260] sm:$0xff]
    %v779 = vld [vmem:[#allocation7 + $0x268] sm:$0xff]
    %v780 = vld [vmem:[#allocation7 + $0x270] sm:$0xff]
    %v781 = vld [vmem:[#allocation7 + $0x278] sm:$0xff]
    %v782 = vld [vmem:[#allocation7 + $0x280] sm:$0xff]
    %v783 = vld [vmem:[#allocation7 + $0x288] sm:$0xff]
    %v784 = vld [vmem:[#allocation7 + $0x290] sm:$0xff]
    %v785 = vld [vmem:[#allocation7 + $0x298] sm:$0xff]
    %v786 = vld [vmem:[#allocation7 + $0x2a0] sm:$0xff]
    %v787 = vld [vmem:[#allocation7 + $0x2a8] sm:$0xff]
    %v788 = vld [vmem:[#allocation7 + $0x2b0] sm:$0xff]
    %v789 = vld [vmem:[#allocation7 + $0x2b8] sm:$0xff]
    %v790 = vld [vmem:[#allocation7 + $0x2c0] sm:$0xff]
    %v791 = vld [vmem:[#allocation7 + $0x2c8] sm:$0xff]
    %v792 = vld [vmem:[#allocation7 + $0x2d0] sm:$0xff]
    %v793 = vld [vmem:[#allocation7 + $0x2d8] sm:$0xff]
    %v794 = vld [vmem:[#allocation7 + $0x2e0] sm:$0xff]
    %v795 = vld [vmem:[#allocation7 + $0x2e8] sm:$0xff]
    %v796 = vld [vmem:[#allocation7 + $0x2f0] sm:$0xff]
    %v797 = vld [vmem:[#allocation7 + $0x2f8] sm:$0xff]
    %v798 = vld [vmem:[#allocation7 + $0x300] sm:$0xff]
    %v799 = vld [vmem:[#allocation7 + $0x308] sm:$0xff]
    %v800 = vld [vmem:[#allocation7 + $0x310] sm:$0xff]
    %v801 = vld [vmem:[#allocation7 + $0x318] sm:$0xff]
    %v802 = vld [vmem:[#allocation7 + $0x320] sm:$0xff]
    %v803 = vld [vmem:[#allocation7 + $0x328] sm:$0xff]
    %v804 = vld [vmem:[#allocation7 + $0x330] sm:$0xff]
    %v805 = vld [vmem:[#allocation7 + $0x338] sm:$0xff]
    %v806 = vld [vmem:[#allocation7 + $0x340] sm:$0xff]
    %v807 = vld [vmem:[#allocation7 + $0x348] sm:$0xff]
    %v808 = vld [vmem:[#allocation7 + $0x350] sm:$0xff]
    %v809 = vld [vmem:[#allocation7 + $0x358] sm:$0xff]
    %v810 = vld [vmem:[#allocation7 + $0x360] sm:$0xff]
    %v811 = vld [vmem:[#allocation7 + $0x368] sm:$0xff]
    %v812 = vld [vmem:[#allocation7 + $0x370] sm:$0xff]
    %v813 = vld [vmem:[#allocation7 + $0x378] sm:$0xff]
    %v814 = vld [vmem:[#allocation7 + $0x380] sm:$0xff]
    %v815 = vld [vmem:[#allocation7 + $0x388] sm:$0xff]
    %v816 = vld [vmem:[#allocation7 + $0x390] sm:$0xff]
    %v817 = vld [vmem:[#allocation7 + $0x398] sm:$0xff]
    %v818 = vld [vmem:[#allocation7 + $0x3a0] sm:$0xff]
    %v819 = vld [vmem:[#allocation7 + $0x3a8] sm:$0xff]
    %v820 = vld [vmem:[#allocation7 + $0x3b0] sm:$0xff]
    %v821 = vld [vmem:[#allocation7 + $0x3b8] sm:$0xff]
    %v822 = vld [vmem:[#allocation7 + $0x3c0] sm:$0xff]
    %v823 = vld [vmem:[#allocation7 + $0x3c8] sm:$0xff]
    %v824 = vld [vmem:[#allocation7 + $0x3d0] sm:$0xff]
    %v825 = vld [vmem:[#allocation7 + $0x3d8] sm:$0xff]
    %v826 = vld [vmem:[#allocation7 + $0x3e0] sm:$0xff]
    %v827 = vld [vmem:[#allocation7 + $0x3e8] sm:$0xff]
    %v828 = vld [vmem:[#allocation7 + $0x3f0] sm:$0xff]
    %v829 = vld [vmem:[#allocation7 + $0x3f8] sm:$0xff]
    %v830 = vld [vmem:[%s4] sm:$0xf]
    %v832 = vlaneseq
    %v833 = vshrl.u32 %v832, 7
    %v834 = vsub.s32 0, %v833
    %v835 = vrot.slane %v830, %v834
    %v836 = vlaneseq
    %v837 = vshrl.u32 %v836, 7
    %v838 = vsub.s32 1, %v837
    %v839 = vrot.slane %v830, %v838
    %v840 = vlaneseq
    %v841 = vshrl.u32 %v840, 7
    %v842 = vsub.s32 2, %v841
    %v843 = vrot.slane %v830, %v842
    %v844 = vlaneseq
    %v845 = vshrl.u32 %v844, 7
    %v846 = vsub.s32 3, %v845
    %v847 = vrot.slane %v830, %v846
    %v980 = vunpack.c.l.b16 %v702
    %v981 = vunpack.c.h.b16 %v702
    %v982 = vunpack.c.l.b16 %v703
    %v983 = vunpack.c.h.b16 %v703
    %v984 = vunpack.c.l.b16 %v704
    %v985 = vunpack.c.h.b16 %v704
    %v986 = vunpack.c.l.b16 %v705
    %v987 = vunpack.c.h.b16 %v705
    %v988 = vunpack.c.l.b16 %v706
    %v989 = vunpack.c.h.b16 %v706
    %v990 = vunpack.c.l.b16 %v707
    %v991 = vunpack.c.h.b16 %v707
    %v992 = vunpack.c.l.b16 %v708
    %v993 = vunpack.c.h.b16 %v708
    %v994 = vunpack.c.l.b16 %v709
    %v995 = vunpack.c.h.b16 %v709
    %v996 = vunpack.c.l.b16 %v710
    %v997 = vunpack.c.h.b16 %v710
    %v998 = vunpack.c.l.b16 %v711
    %v999 = vunpack.c.h.b16 %v711
    %v1000 = vunpack.c.l.b16 %v712
    %v1001 = vunpack.c.h.b16 %v712
    %v1002 = vunpack.c.l.b16 %v713
    %v1003 = vunpack.c.h.b16 %v713
    %v1004 = vunpack.c.l.b16 %v714
    %v1005 = vunpack.c.h.b16 %v714
    %v1006 = vunpack.c.l.b16 %v715
    %v1007 = vunpack.c.h.b16 %v715
    %v1008 = vunpack.c.l.b16 %v716
    %v1009 = vunpack.c.h.b16 %v716
    %v1010 = vunpack.c.l.b16 %v717
    %v1011 = vunpack.c.h.b16 %v717
    %v1012 = vunpack.c.l.b16 %v718
    %v1013 = vunpack.c.h.b16 %v718
    %v1014 = vunpack.c.l.b16 %v719
    %v1015 = vunpack.c.h.b16 %v719
    %v1016 = vunpack.c.l.b16 %v720
    %v1017 = vunpack.c.h.b16 %v720
    %v1018 = vunpack.c.l.b16 %v721
    %v1019 = vunpack.c.h.b16 %v721
    %v1020 = vunpack.c.l.b16 %v722
    %v1021 = vunpack.c.h.b16 %v722
    %v1022 = vunpack.c.l.b16 %v723
    %v1023 = vunpack.c.h.b16 %v723
    %v1024 = vunpack.c.l.b16 %v724
    %v1025 = vunpack.c.h.b16 %v724
    %v1026 = vunpack.c.l.b16 %v725
    %v1027 = vunpack.c.h.b16 %v725
    %v1028 = vunpack.c.l.b16 %v726
    %v1029 = vunpack.c.h.b16 %v726
    %v1030 = vunpack.c.l.b16 %v727
    %v1031 = vunpack.c.h.b16 %v727
    %v1032 = vunpack.c.l.b16 %v728
    %v1033 = vunpack.c.h.b16 %v728
    %v1034 = vunpack.c.l.b16 %v729
    %v1035 = vunpack.c.h.b16 %v729
    %v1036 = vunpack.c.l.b16 %v730
    %v1037 = vunpack.c.h.b16 %v730
    %v1038 = vunpack.c.l.b16 %v731
    %v1039 = vunpack.c.h.b16 %v731
    %v1040 = vunpack.c.l.b16 %v732
    %v1041 = vunpack.c.h.b16 %v732
    %v1042 = vunpack.c.l.b16 %v733
    %v1043 = vunpack.c.h.b16 %v733
    %v1044 = vunpack.c.l.b16 %v734
    %v1045 = vunpack.c.h.b16 %v734
    %v1046 = vunpack.c.l.b16 %v735
    %v1047 = vunpack.c.h.b16 %v735
    %v1048 = vunpack.c.l.b16 %v736
    %v1049 = vunpack.c.h.b16 %v736
    %v1050 = vunpack.c.l.b16 %v737
    %v1051 = vunpack.c.h.b16 %v737
    %v1052 = vunpack.c.l.b16 %v738
    %v1053 = vunpack.c.h.b16 %v738
    %v1054 = vunpack.c.l.b16 %v739
    %v1055 = vunpack.c.h.b16 %v739
    %v1056 = vunpack.c.l.b16 %v740
    %v1057 = vunpack.c.h.b16 %v740
    %v1058 = vunpack.c.l.b16 %v741
    %v1059 = vunpack.c.h.b16 %v741
    %v1060 = vunpack.c.l.b16 %v742
    %v1061 = vunpack.c.h.b16 %v742
    %v1062 = vunpack.c.l.b16 %v743
    %v1063 = vunpack.c.h.b16 %v743
    %v1064 = vunpack.c.l.b16 %v744
    %v1065 = vunpack.c.h.b16 %v744
    %v1066 = vunpack.c.l.b16 %v745
    %v1067 = vunpack.c.h.b16 %v745
    %v1068 = vunpack.c.l.b16 %v746
    %v1069 = vunpack.c.h.b16 %v746
    %v1070 = vunpack.c.l.b16 %v747
    %v1071 = vunpack.c.h.b16 %v747
    %v1072 = vunpack.c.l.b16 %v748
    %v1073 = vunpack.c.h.b16 %v748
    %v1074 = vunpack.c.l.b16 %v749
    %v1075 = vunpack.c.h.b16 %v749
    %v1076 = vunpack.c.l.b16 %v750
    %v1077 = vunpack.c.h.b16 %v750
    %v1078 = vunpack.c.l.b16 %v751
    %v1079 = vunpack.c.h.b16 %v751
    %v1080 = vunpack.c.l.b16 %v752
    %v1081 = vunpack.c.h.b16 %v752
    %v1082 = vunpack.c.l.b16 %v753
    %v1083 = vunpack.c.h.b16 %v753
    %v1084 = vunpack.c.l.b16 %v754
    %v1085 = vunpack.c.h.b16 %v754
    %v1086 = vunpack.c.l.b16 %v755
    %v1087 = vunpack.c.h.b16 %v755
    %v1088 = vunpack.c.l.b16 %v756
    %v1089 = vunpack.c.h.b16 %v756
    %v1090 = vunpack.c.l.b16 %v757
    %v1091 = vunpack.c.h.b16 %v757
    %v1092 = vunpack.c.l.b16 %v758
    %v1093 = vunpack.c.h.b16 %v758
    %v1094 = vunpack.c.l.b16 %v759
    %v1095 = vunpack.c.h.b16 %v759
    %v1096 = vunpack.c.l.b16 %v760
    %v1097 = vunpack.c.h.b16 %v760
    %v1098 = vunpack.c.l.b16 %v761
    %v1099 = vunpack.c.h.b16 %v761
    %v1100 = vunpack.c.l.b16 %v762
    %v1101 = vunpack.c.h.b16 %v762
    %v1102 = vunpack.c.l.b16 %v763
    %v1103 = vunpack.c.h.b16 %v763
    %v1104 = vunpack.c.l.b16 %v764
    %v1105 = vunpack.c.h.b16 %v764
    %v1106 = vunpack.c.l.b16 %v765
    %v1107 = vunpack.c.h.b16 %v765
    %v1108 = vunpack.c.l.b16 %v766
    %v1109 = vunpack.c.h.b16 %v766
    %v1110 = vunpack.c.l.b16 %v767
    %v1111 = vunpack.c.h.b16 %v767
    %v1112 = vunpack.c.l.b16 %v768
    %v1113 = vunpack.c.h.b16 %v768
    %v1114 = vunpack.c.l.b16 %v769
    %v1115 = vunpack.c.h.b16 %v769
    %v1116 = vunpack.c.l.b16 %v770
    %v1117 = vunpack.c.h.b16 %v770
    %v1118 = vunpack.c.l.b16 %v771
    %v1119 = vunpack.c.h.b16 %v771
    %v1120 = vunpack.c.l.b16 %v772
    %v1121 = vunpack.c.h.b16 %v772
    %v1122 = vunpack.c.l.b16 %v773
    %v1123 = vunpack.c.h.b16 %v773
    %v1124 = vunpack.c.l.b16 %v774
    %v1125 = vunpack.c.h.b16 %v774
    %v1126 = vunpack.c.l.b16 %v775
    %v1127 = vunpack.c.h.b16 %v775
    %v1128 = vunpack.c.l.b16 %v776
    %v1129 = vunpack.c.h.b16 %v776
    %v1130 = vunpack.c.l.b16 %v777
    %v1131 = vunpack.c.h.b16 %v777
    %v1132 = vunpack.c.l.b16 %v778
    %v1133 = vunpack.c.h.b16 %v778
    %v1134 = vunpack.c.l.b16 %v779
    %v1135 = vunpack.c.h.b16 %v779
    %v1136 = vunpack.c.l.b16 %v780
    %v1137 = vunpack.c.h.b16 %v780
    %v1138 = vunpack.c.l.b16 %v781
    %v1139 = vunpack.c.h.b16 %v781
    %v1140 = vunpack.c.l.b16 %v782
    %v1141 = vunpack.c.h.b16 %v782
    %v1142 = vunpack.c.l.b16 %v783
    %v1143 = vunpack.c.h.b16 %v783
    %v1144 = vunpack.c.l.b16 %v784
    %v1145 = vunpack.c.h.b16 %v784
    %v1146 = vunpack.c.l.b16 %v785
    %v1147 = vunpack.c.h.b16 %v785
    %v1148 = vunpack.c.l.b16 %v786
    %v1149 = vunpack.c.h.b16 %v786
    %v1150 = vunpack.c.l.b16 %v787
    %v1151 = vunpack.c.h.b16 %v787
    %v1152 = vunpack.c.l.b16 %v788
    %v1153 = vunpack.c.h.b16 %v788
    %v1154 = vunpack.c.l.b16 %v789
    %v1155 = vunpack.c.h.b16 %v789
    %v1156 = vunpack.c.l.b16 %v790
    %v1157 = vunpack.c.h.b16 %v790
    %v1158 = vunpack.c.l.b16 %v791
    %v1159 = vunpack.c.h.b16 %v791
    %v1160 = vunpack.c.l.b16 %v792
    %v1161 = vunpack.c.h.b16 %v792
    %v1162 = vunpack.c.l.b16 %v793
    %v1163 = vunpack.c.h.b16 %v793
    %v1164 = vunpack.c.l.b16 %v794
    %v1165 = vunpack.c.h.b16 %v794
    %v1166 = vunpack.c.l.b16 %v795
    %v1167 = vunpack.c.h.b16 %v795
    %v1168 = vunpack.c.l.b16 %v796
    %v1169 = vunpack.c.h.b16 %v796
    %v1170 = vunpack.c.l.b16 %v797
    %v1171 = vunpack.c.h.b16 %v797
    %v1172 = vunpack.c.l.b16 %v798
    %v1173 = vunpack.c.h.b16 %v798
    %v1174 = vunpack.c.l.b16 %v799
    %v1175 = vunpack.c.h.b16 %v799
    %v1176 = vunpack.c.l.b16 %v800
    %v1177 = vunpack.c.h.b16 %v800
    %v1178 = vunpack.c.l.b16 %v801
    %v1179 = vunpack.c.h.b16 %v801
    %v1180 = vunpack.c.l.b16 %v802
    %v1181 = vunpack.c.h.b16 %v802
    %v1182 = vunpack.c.l.b16 %v803
    %v1183 = vunpack.c.h.b16 %v803
    %v1184 = vunpack.c.l.b16 %v804
    %v1185 = vunpack.c.h.b16 %v804
    %v1186 = vunpack.c.l.b16 %v805
    %v1187 = vunpack.c.h.b16 %v805
    %v1188 = vunpack.c.l.b16 %v806
    %v1189 = vunpack.c.h.b16 %v806
    %v1190 = vunpack.c.l.b16 %v807
    %v1191 = vunpack.c.h.b16 %v807
    %v1192 = vunpack.c.l.b16 %v808
    %v1193 = vunpack.c.h.b16 %v808
    %v1194 = vunpack.c.l.b16 %v809
    %v1195 = vunpack.c.h.b16 %v809
    %v1196 = vunpack.c.l.b16 %v810
    %v1197 = vunpack.c.h.b16 %v810
    %v1198 = vunpack.c.l.b16 %v811
    %v1199 = vunpack.c.h.b16 %v811
    %v1200 = vunpack.c.l.b16 %v812
    %v1201 = vunpack.c.h.b16 %v812
    %v1202 = vunpack.c.l.b16 %v813
    %v1203 = vunpack.c.h.b16 %v813
    %v1204 = vunpack.c.l.b16 %v814
    %v1205 = vunpack.c.h.b16 %v814
    %v1206 = vunpack.c.l.b16 %v815
    %v1207 = vunpack.c.h.b16 %v815
    %v1208 = vunpack.c.l.b16 %v816
    %v1209 = vunpack.c.h.b16 %v816
    %v1210 = vunpack.c.l.b16 %v817
    %v1211 = vunpack.c.h.b16 %v817
    %v1212 = vunpack.c.l.b16 %v818
    %v1213 = vunpack.c.h.b16 %v818
    %v1214 = vunpack.c.l.b16 %v819
    %v1215 = vunpack.c.h.b16 %v819
    %v1216 = vunpack.c.l.b16 %v820
    %v1217 = vunpack.c.h.b16 %v820
    %v1218 = vunpack.c.l.b16 %v821
    %v1219 = vunpack.c.h.b16 %v821
    %v1220 = vunpack.c.l.b16 %v822
    %v1221 = vunpack.c.h.b16 %v822
    %v1222 = vunpack.c.l.b16 %v823
    %v1223 = vunpack.c.h.b16 %v823
    %v1224 = vunpack.c.l.b16 %v824
    %v1225 = vunpack.c.h.b16 %v824
    %v1226 = vunpack.c.l.b16 %v825
    %v1227 = vunpack.c.h.b16 %v825
    %v1228 = vunpack.c.l.b16 %v826
    %v1229 = vunpack.c.h.b16 %v826
    %v1230 = vunpack.c.l.b16 %v827
    %v1231 = vunpack.c.h.b16 %v827
    %v1232 = vunpack.c.l.b16 %v828
    %v1233 = vunpack.c.h.b16 %v828
    %v1234 = vunpack.c.l.b16 %v829
    %v1235 = vunpack.c.h.b16 %v829
    %v1236 = vpack.c.b16 %v984, %v980
    %v1237 = vpack.c.b16 %v985, %v981
    %v1238 = vpack.c.b16 %v986, %v982
    %v1239 = vpack.c.b16 %v987, %v983
    %v1240 = vpack.c.b16 %v992, %v988
    %v1241 = vpack.c.b16 %v993, %v989
    %v1242 = vpack.c.b16 %v994, %v990
    %v1243 = vpack.c.b16 %v995, %v991
    %v1244 = vpack.c.b16 %v1000, %v996
    %v1245 = vpack.c.b16 %v1001, %v997
    %v1246 = vpack.c.b16 %v1002, %v998
    %v1247 = vpack.c.b16 %v1003, %v999
    %v1248 = vpack.c.b16 %v1008, %v1004
    %v1249 = vpack.c.b16 %v1009, %v1005
    %v1250 = vpack.c.b16 %v1010, %v1006
    %v1251 = vpack.c.b16 %v1011, %v1007
    %v1252 = vpack.c.b16 %v1016, %v1012
    %v1253 = vpack.c.b16 %v1017, %v1013
    %v1254 = vpack.c.b16 %v1018, %v1014
    %v1255 = vpack.c.b16 %v1019, %v1015
    %v1256 = vpack.c.b16 %v1024, %v1020
    %v1257 = vpack.c.b16 %v1025, %v1021
    %v1258 = vpack.c.b16 %v1026, %v1022
    %v1259 = vpack.c.b16 %v1027, %v1023
    %v1260 = vpack.c.b16 %v1032, %v1028
    %v1261 = vpack.c.b16 %v1033, %v1029
    %v1262 = vpack.c.b16 %v1034, %v1030
    %v1263 = vpack.c.b16 %v1035, %v1031
    %v1264 = vpack.c.b16 %v1040, %v1036
    %v1265 = vpack.c.b16 %v1041, %v1037
    %v1266 = vpack.c.b16 %v1042, %v1038
    %v1267 = vpack.c.b16 %v1043, %v1039
    %v1268 = vpack.c.b16 %v1048, %v1044
    %v1269 = vpack.c.b16 %v1049, %v1045
    %v1270 = vpack.c.b16 %v1050, %v1046
    %v1271 = vpack.c.b16 %v1051, %v1047
    %v1272 = vpack.c.b16 %v1056, %v1052
    %v1273 = vpack.c.b16 %v1057, %v1053
    %v1274 = vpack.c.b16 %v1058, %v1054
    %v1275 = vpack.c.b16 %v1059, %v1055
    %v1276 = vpack.c.b16 %v1064, %v1060
    %v1277 = vpack.c.b16 %v1065, %v1061
    %v1278 = vpack.c.b16 %v1066, %v1062
    %v1279 = vpack.c.b16 %v1067, %v1063
    %v1280 = vpack.c.b16 %v1072, %v1068
    %v1281 = vpack.c.b16 %v1073, %v1069
    %v1282 = vpack.c.b16 %v1074, %v1070
    %v1283 = vpack.c.b16 %v1075, %v1071
    %v1284 = vpack.c.b16 %v1080, %v1076
    %v1285 = vpack.c.b16 %v1081, %v1077
    %v1286 = vpack.c.b16 %v1082, %v1078
    %v1287 = vpack.c.b16 %v1083, %v1079
    %v1288 = vpack.c.b16 %v1088, %v1084
    %v1289 = vpack.c.b16 %v1089, %v1085
    %v1290 = vpack.c.b16 %v1090, %v1086
    %v1291 = vpack.c.b16 %v1091, %v1087
    %v1292 = vpack.c.b16 %v1096, %v1092
    %v1293 = vpack.c.b16 %v1097, %v1093
    %v1294 = vpack.c.b16 %v1098, %v1094
    %v1295 = vpack.c.b16 %v1099, %v1095
    %v1296 = vpack.c.b16 %v1104, %v1100
    %v1297 = vpack.c.b16 %v1105, %v1101
    %v1298 = vpack.c.b16 %v1106, %v1102
    %v1299 = vpack.c.b16 %v1107, %v1103
    %v1300 = vpack.c.b16 %v1112, %v1108
    %v1301 = vpack.c.b16 %v1113, %v1109
    %v1302 = vpack.c.b16 %v1114, %v1110
    %v1303 = vpack.c.b16 %v1115, %v1111
    %v1304 = vpack.c.b16 %v1120, %v1116
    %v1305 = vpack.c.b16 %v1121, %v1117
    %v1306 = vpack.c.b16 %v1122, %v1118
    %v1307 = vpack.c.b16 %v1123, %v1119
    %v1308 = vpack.c.b16 %v1128, %v1124
    %v1309 = vpack.c.b16 %v1129, %v1125
    %v1310 = vpack.c.b16 %v1130, %v1126
    %v1311 = vpack.c.b16 %v1131, %v1127
    %v1312 = vpack.c.b16 %v1136, %v1132
    %v1313 = vpack.c.b16 %v1137, %v1133
    %v1314 = vpack.c.b16 %v1138, %v1134
    %v1315 = vpack.c.b16 %v1139, %v1135
    %v1316 = vpack.c.b16 %v1144, %v1140
    %v1317 = vpack.c.b16 %v1145, %v1141
    %v1318 = vpack.c.b16 %v1146, %v1142
    %v1319 = vpack.c.b16 %v1147, %v1143
    %v1320 = vpack.c.b16 %v1152, %v1148
    %v1321 = vpack.c.b16 %v1153, %v1149
    %v1322 = vpack.c.b16 %v1154, %v1150
    %v1323 = vpack.c.b16 %v1155, %v1151
    %v1324 = vpack.c.b16 %v1160, %v1156
    %v1325 = vpack.c.b16 %v1161, %v1157
    %v1326 = vpack.c.b16 %v1162, %v1158
    %v1327 = vpack.c.b16 %v1163, %v1159
    %v1328 = vpack.c.b16 %v1168, %v1164
    %v1329 = vpack.c.b16 %v1169, %v1165
    %v1330 = vpack.c.b16 %v1170, %v1166
    %v1331 = vpack.c.b16 %v1171, %v1167
    %v1332 = vpack.c.b16 %v1176, %v1172
    %v1333 = vpack.c.b16 %v1177, %v1173
    %v1334 = vpack.c.b16 %v1178, %v1174
    %v1335 = vpack.c.b16 %v1179, %v1175
    %v1336 = vpack.c.b16 %v1184, %v1180
    %v1337 = vpack.c.b16 %v1185, %v1181
    %v1338 = vpack.c.b16 %v1186, %v1182
    %v1339 = vpack.c.b16 %v1187, %v1183
    %v1340 = vpack.c.b16 %v1192, %v1188
    %v1341 = vpack.c.b16 %v1193, %v1189
    %v1342 = vpack.c.b16 %v1194, %v1190
    %v1343 = vpack.c.b16 %v1195, %v1191
    %v1344 = vpack.c.b16 %v1200, %v1196
    %v1345 = vpack.c.b16 %v1201, %v1197
    %v1346 = vpack.c.b16 %v1202, %v1198
    %v1347 = vpack.c.b16 %v1203, %v1199
    %v1348 = vpack.c.b16 %v1208, %v1204
    %v1349 = vpack.c.b16 %v1209, %v1205
    %v1350 = vpack.c.b16 %v1210, %v1206
    %v1351 = vpack.c.b16 %v1211, %v1207
    %v1352 = vpack.c.b16 %v1216, %v1212
    %v1353 = vpack.c.b16 %v1217, %v1213
    %v1354 = vpack.c.b16 %v1218, %v1214
    %v1355 = vpack.c.b16 %v1219, %v1215
    %v1356 = vpack.c.b16 %v1224, %v1220
    %v1357 = vpack.c.b16 %v1225, %v1221
    %v1358 = vpack.c.b16 %v1226, %v1222
    %v1359 = vpack.c.b16 %v1227, %v1223
    %v1360 = vpack.c.b16 %v1232, %v1228
    %v1361 = vpack.c.b16 %v1233, %v1229
    %v1362 = vpack.c.b16 %v1234, %v1230
    %v1363 = vpack.c.b16 %v1235, %v1231
    %1492 = vmatprep.subr.bf16.mxu0 %v1237
    %1493 = vmatpush1.bf16.msra.mxu0 %v1236
    %1494 = vmatprep.subr.bf16.mxu0 %v1241
    %1495 = vmatpush1.bf16.msra.mxu0 %v1240
    %1496 = vmatprep.subr.bf16.mxu0 %v1245
    %1497 = vmatpush1.bf16.msra.mxu0 %v1244
    %1498 = vmatprep.subr.bf16.mxu0 %v1249
    %1499 = vmatpush1.bf16.msra.mxu0 %v1248
    %1500 = vmatprep.subr.bf16.mxu0 %v1253
    %1501 = vmatpush1.bf16.msra.mxu0 %v1252
    %1502 = vmatprep.subr.bf16.mxu0 %v1257
    %1503 = vmatpush1.bf16.msra.mxu0 %v1256
    %1504 = vmatprep.subr.bf16.mxu0 %v1261
    %1505 = vmatpush1.bf16.msra.mxu0 %v1260
    %1506 = vmatprep.subr.bf16.mxu0 %v1265
    %1507 = vmatpush1.bf16.msra.mxu0 %v1264
    %1508 = vmatprep.subr.bf16.mxu0 %v1269
    %1509 = vmatpush1.bf16.msra.mxu0 %v1268
    %1510 = vmatprep.subr.bf16.mxu0 %v1273
    %1511 = vmatpush1.bf16.msra.mxu0 %v1272
    %1512 = vmatprep.subr.bf16.mxu0 %v1277
    %1513 = vmatpush1.bf16.msra.mxu0 %v1276
    %1514 = vmatprep.subr.bf16.mxu0 %v1281
    %1515 = vmatpush1.bf16.msra.mxu0 %v1280
    %1516 = vmatprep.subr.bf16.mxu0 %v1285
    %1517 = vmatpush1.bf16.msra.mxu0 %v1284
    %1518 = vmatprep.subr.bf16.mxu0 %v1289
    %1519 = vmatpush1.bf16.msra.mxu0 %v1288
    %1520 = vmatprep.subr.bf16.mxu0 %v1293
    %1521 = vmatpush1.bf16.msra.mxu0 %v1292
    %1522 = vmatprep.subr.bf16.mxu0 %v1297
    %1523 = vmatpush1.bf16.msra.mxu0 %v1296
    %1524 = vmatprep.mubr.bf16.mxu0 %v699
    %1525 = vmatmul.mubr.bf16.gmra.mrb[0].mxu0 %v698
    %v1526 = vpop.f32.mrb[0].mxu0
    %v1527 = vadd.f32 %v835, %v1526
    %v1528 = vpop.f32.mrb[0].mxu0
    %v1529 = vadd.f32 %v839, %v1528
    %v1530 = vpop.f32.mrb[0].mxu0
    %v1531 = vadd.f32 %v835, %v1530
    %v1532 = vpop.f32.mrb[0].mxu0
    %v1533 = vadd.f32 %v839, %v1532
    %1534 = vdwg.mxu0
    %1535 = vmatprep.subr.bf16.mxu0 %v1301
    %1536 = vmatpush1.bf16.msra.mxu0 %v1300
    %1537 = vmatprep.subr.bf16.mxu0 %v1305
    %1538 = vmatpush1.bf16.msra.mxu0 %v1304
    %1539 = vmatprep.subr.bf16.mxu0 %v1309
    %1540 = vmatpush1.bf16.msra.mxu0 %v1308
    %1541 = vmatprep.subr.bf16.mxu0 %v1313
    %1542 = vmatpush1.bf16.msra.mxu0 %v1312
    %1543 = vmatprep.subr.bf16.mxu0 %v1317
    %1544 = vmatpush1.bf16.msra.mxu0 %v1316
    %1545 = vmatprep.subr.bf16.mxu0 %v1321
    %1546 = vmatpush1.bf16.msra.mxu0 %v1320
    %1547 = vmatprep.subr.bf16.mxu0 %v1325
    %1548 = vmatpush1.bf16.msra.mxu0 %v1324
    %1549 = vmatprep.subr.bf16.mxu0 %v1329
    %1550 = vmatpush1.bf16.msra.mxu0 %v1328
    %1551 = vmatprep.subr.bf16.mxu0 %v1333
    %1552 = vmatpush1.bf16.msra.mxu0 %v1332
    %1553 = vmatprep.subr.bf16.mxu0 %v1337
    %1554 = vmatpush1.bf16.msra.mxu0 %v1336
    %1555 = vmatprep.subr.bf16.mxu0 %v1341
    %1556 = vmatpush1.bf16.msra.mxu0 %v1340
    %1557 = vmatprep.subr.bf16.mxu0 %v1345
    %1558 = vmatpush1.bf16.msra.mxu0 %v1344
    %1559 = vmatprep.subr.bf16.mxu0 %v1349
    %1560 = vmatpush1.bf16.msra.mxu0 %v1348
    %1561 = vmatprep.subr.bf16.mxu0 %v1353
    %1562 = vmatpush1.bf16.msra.mxu0 %v1352
    %1563 = vmatprep.subr.bf16.mxu0 %v1357
    %1564 = vmatpush1.bf16.msra.mxu0 %v1356
    %1565 = vmatprep.subr.bf16.mxu0 %v1361
    %1566 = vmatpush1.bf16.msra.mxu0 %v1360
    %1567 = vmatprep.mubr.bf16.mxu0 %v701
    %1568 = vmatmul.mubr.bf16.gmra.mrb[0].mxu0 %v700
    %v1569 = vpop.f32.mrb[0].mxu0
    %v1570 = vadd.f32 %v1527, %v1569
    %v1571 = vpop.f32.mrb[0].mxu0
    %v1572 = vadd.f32 %v1529, %v1571
    %v1573 = vpop.f32.mrb[0].mxu0
    %v1574 = vadd.f32 %v1531, %v1573
    %v1575 = vpop.f32.mrb[0].mxu0
    %v1576 = vadd.f32 %v1533, %v1575
    %1577 = vdwg.mxu0
    %1578 = vmatprep.subr.bf16.mxu0 %v1239
    %1579 = vmatpush1.bf16.msra.mxu0 %v1238
    %1580 = vmatprep.subr.bf16.mxu0 %v1243
    %1581 = vmatpush1.bf16.msra.mxu0 %v1242
    %1582 = vmatprep.subr.bf16.mxu0 %v1247
    %1583 = vmatpush1.bf16.msra.mxu0 %v1246
    %1584 = vmatprep.subr.bf16.mxu0 %v1251
    %1585 = vmatpush1.bf16.msra.mxu0 %v1250
    %1586 = vmatprep.subr.bf16.mxu0 %v1255
    %1587 = vmatpush1.bf16.msra.mxu0 %v1254
    %1588 = vmatprep.subr.bf16.mxu0 %v1259
    %1589 = vmatpush1.bf16.msra.mxu0 %v1258
    %1590 = vmatprep.subr.bf16.mxu0 %v1263
    %1591 = vmatpush1.bf16.msra.mxu0 %v1262
    %1592 = vmatprep.subr.bf16.mxu0 %v1267
    %1593 = vmatpush1.bf16.msra.mxu0 %v1266
    %1594 = vmatprep.subr.bf16.mxu0 %v1271
    %1595 = vmatpush1.bf16.msra.mxu0 %v1270
    %1596 = vmatprep.subr.bf16.mxu0 %v1275
    %1597 = vmatpush1.bf16.msra.mxu0 %v1274
    %1598 = vmatprep.subr.bf16.mxu0 %v1279
    %1599 = vmatpush1.bf16.msra.mxu0 %v1278
    %1600 = vmatprep.subr.bf16.mxu0 %v1283
    %1601 = vmatpush1.bf16.msra.mxu0 %v1282
    %1602 = vmatprep.subr.bf16.mxu0 %v1287
    %1603 = vmatpush1.bf16.msra.mxu0 %v1286
    %1604 = vmatprep.subr.bf16.mxu0 %v1291
    %1605 = vmatpush1.bf16.msra.mxu0 %v1290
    %1606 = vmatprep.subr.bf16.mxu0 %v1295
    %1607 = vmatpush1.bf16.msra.mxu0 %v1294
    %1608 = vmatprep.subr.bf16.mxu0 %v1299
    %1609 = vmatpush1.bf16.msra.mxu0 %v1298
    %1610 = vmatprep.mubr.bf16.mxu0 %v699
    %1611 = vmatmul.mubr.bf16.gmra.mrb[0].mxu0 %v698
    %v1612 = vpop.f32.mrb[0].mxu0
    %v1613 = vadd.f32 %v843, %v1612
    %v1614 = vpop.f32.mrb[0].mxu0
    %v1615 = vadd.f32 %v847, %v1614
    %v1616 = vpop.f32.mrb[0].mxu0
    %v1617 = vadd.f32 %v843, %v1616
    %v1618 = vpop.f32.mrb[0].mxu0
    %v1619 = vadd.f32 %v847, %v1618
    %1620 = vdwg.mxu0
    %1621 = vmatprep.subr.bf16.mxu0 %v1303
    %1622 = vmatpush1.bf16.msra.mxu0 %v1302
    %1623 = vmatprep.subr.bf16.mxu0 %v1307
    %1624 = vmatpush1.bf16.msra.mxu0 %v1306
    %1625 = vmatprep.subr.bf16.mxu0 %v1311
    %1626 = vmatpush1.bf16.msra.mxu0 %v1310
    %1627 = vmatprep.subr.bf16.mxu0 %v1315
    %1628 = vmatpush1.bf16.msra.mxu0 %v1314
    %1629 = vmatprep.subr.bf16.mxu0 %v1319
    %1630 = vmatpush1.bf16.msra.mxu0 %v1318
    %1631 = vmatprep.subr.bf16.mxu0 %v1323
    %1632 = vmatpush1.bf16.msra.mxu0 %v1322
    %1633 = vmatprep.subr.bf16.mxu0 %v1327
    %1634 = vmatpush1.bf16.msra.mxu0 %v1326
    %1635 = vmatprep.subr.bf16.mxu0 %v1331
    %1636 = vmatpush1.bf16.msra.mxu0 %v1330
    %1637 = vmatprep.subr.bf16.mxu0 %v1335
    %1638 = vmatpush1.bf16.msra.mxu0 %v1334
    %1639 = vmatprep.subr.bf16.mxu0 %v1339
    %1640 = vmatpush1.bf16.msra.mxu0 %v1338
    %1641 = vmatprep.subr.bf16.mxu0 %v1343
    %1642 = vmatpush1.bf16.msra.mxu0 %v1342
    %1643 = vmatprep.subr.bf16.mxu0 %v1347
    %1644 = vmatpush1.bf16.msra.mxu0 %v1346
    %1645 = vmatprep.subr.bf16.mxu0 %v1351
    %1646 = vmatpush1.bf16.msra.mxu0 %v1350
    %1647 = vmatprep.subr.bf16.mxu0 %v1355
    %1648 = vmatpush1.bf16.msra.mxu0 %v1354
    %1649 = vmatprep.subr.bf16.mxu0 %v1359
    %1650 = vmatpush1.bf16.msra.mxu0 %v1358
    %1651 = vmatprep.subr.bf16.mxu0 %v1363
    %1652 = vmatpush1.bf16.msra.mxu0 %v1362
    %1653 = vmatprep.mubr.bf16.mxu0 %v701
    %1654 = vmatmul.mubr.bf16.gmra.mrb[0].mxu0 %v700
    %v1655 = vpop.f32.mrb[0].mxu0
    %v1656 = vadd.f32 %v1613, %v1655
    %v1657 = vpop.f32.mrb[0].mxu0
    %v1658 = vadd.f32 %v1615, %v1657
    %v1659 = vpop.f32.mrb[0].mxu0
    %v1660 = vadd.f32 %v1617, %v1659
    %v1661 = vpop.f32.mrb[0].mxu0
    %v1662 = vadd.f32 %v1619, %v1661
    %1663 = vdwg.mxu0
    %v1664 = vmul.f32 %v1570, 0.5
    %v1665 = vmul.f32 %v1572, 0.5
    %v1666 = vmul.f32 %v1656, 0.5
    %v1667 = vmul.f32 %v1658, 0.5
    %v1668 = vmul.f32 %v1574, 0.5
    %v1669 = vmul.f32 %v1576, 0.5
    %v1670 = vmul.f32 %v1660, 0.5
    %v1671 = vmul.f32 %v1662, 0.5
    %v1672 = vmul.f32 %v1570, 0.044715
    %v1673 = vmul.f32 %v1572, 0.044715
    %v1674 = vmul.f32 %v1656, 0.044715
    %v1675 = vmul.f32 %v1658, 0.044715
    %v1676 = vmul.f32 %v1574, 0.044715
    %v1677 = vmul.f32 %v1576, 0.044715
    %v1678 = vmul.f32 %v1660, 0.044715
    %v1679 = vmul.f32 %v1662, 0.044715
    %v1680 = vmul.f32 %v1672, %v1570
    %v1681 = vmul.f32 %v1673, %v1572
    %v1682 = vmul.f32 %v1674, %v1656
    %v1683 = vmul.f32 %v1675, %v1658
    %v1684 = vmul.f32 %v1676, %v1574
    %v1685 = vmul.f32 %v1677, %v1576
    %v1686 = vmul.f32 %v1678, %v1660
    %v1687 = vmul.f32 %v1679, %v1662
    %v1688 = vmul.f32 %v1680, %v1570
    %v1689 = vmul.f32 %v1681, %v1572
    %v1690 = vmul.f32 %v1682, %v1656
    %v1691 = vmul.f32 %v1683, %v1658
    %v1692 = vmul.f32 %v1684, %v1574
    %v1693 = vmul.f32 %v1685, %v1576
    %v1694 = vmul.f32 %v1686, %v1660
    %v1695 = vmul.f32 %v1687, %v1662
    %v1696 = vadd.f32 %v1570, %v1688
    %v1697 = vadd.f32 %v1572, %v1689
    %v1698 = vadd.f32 %v1656, %v1690
    %v1699 = vadd.f32 %v1658, %v1691
    %v1700 = vadd.f32 %v1574, %v1692
    %v1701 = vadd.f32 %v1576, %v1693
    %v1702 = vadd.f32 %v1660, %v1694
    %v1703 = vadd.f32 %v1662, %v1695
    %v1704 = vmul.f32 %v1696, 0.7978846
    %v1705 = vmul.f32 %v1697, 0.7978846
    %v1706 = vmul.f32 %v1698, 0.7978846
    %v1707 = vmul.f32 %v1699, 0.7978846
    %v1708 = vmul.f32 %v1700, 0.7978846
    %v1709 = vmul.f32 %v1701, 0.7978846
    %v1710 = vmul.f32 %v1702, 0.7978846
    %v1711 = vmul.f32 %v1703, 0.7978846
    %v1712 = vtanh.pop %v1704
    %v1713 = vtanh.pop %v1705
    %v1714 = vtanh.pop %v1706
    %v1715 = vtanh.pop %v1707
    %v1716 = vtanh.pop %v1708
    %v1717 = vtanh.pop %v1709
    %v1718 = vtanh.pop %v1710
    %v1719 = vtanh.pop %v1711
    %v1720 = vadd.f32 %v1712, 1.0
    %v1721 = vadd.f32 %v1713, 1.0
    %v1722 = vadd.f32 %v1714, 1.0
    %v1723 = vadd.f32 %v1715, 1.0
    %v1724 = vadd.f32 %v1716, 1.0
    %v1725 = vadd.f32 %v1717, 1.0
    %v1726 = vadd.f32 %v1718, 1.0
    %v1727 = vadd.f32 %v1719, 1.0
    %v1728 = vmul.f32 %v1664, %v1720
    %v1729 = vmul.f32 %v1665, %v1721
    %v1730 = vmul.f32 %v1666, %v1722
    %v1731 = vmul.f32 %v1667, %v1723
    %v1732 = vmul.f32 %v1668, %v1724
    %v1733 = vmul.f32 %v1669, %v1725
    %v1734 = vmul.f32 %v1670, %v1726
    %v1735 = vmul.f32 %v1671, %v1727
    %v1736 = vpack.c.bf16 %v1732, %v1728
    %v1737 = vpack.c.bf16 %v1733, %v1729
    %v1738 = vpack.c.bf16 %v1734, %v1730
    %v1739 = vpack.c.bf16 %v1735, %v1731
    %v1740 = vld [vmem:[#allocation8] sm:$0xff]
    %v1741 = vld [vmem:[#allocation8 + $0x8] sm:$0xff]
    %v1742 = vld [vmem:[#allocation8 + $0x10] sm:$0xff]
    %v1743 = vld [vmem:[#allocation8 + $0x18] sm:$0xff]
    %v1744 = vld [vmem:[#allocation8 + $0x20] sm:$0xff]
    %v1745 = vld [vmem:[#allocation8 + $0x28] sm:$0xff]
    %v1746 = vld [vmem:[#allocation8 + $0x30] sm:$0xff]
    %v1747 = vld [vmem:[#allocation8 + $0x38] sm:$0xff]
    %v1748 = vld [vmem:[#allocation8 + $0x40] sm:$0xff]
    %v1749 = vld [vmem:[#allocation8 + $0x48] sm:$0xff]
    %v1750 = vld [vmem:[#allocation8 + $0x50] sm:$0xff]
    %v1751 = vld [vmem:[#allocation8 + $0x58] sm:$0xff]
    %v1752 = vld [vmem:[#allocation8 + $0x60] sm:$0xff]
    %v1753 = vld [vmem:[#allocation8 + $0x68] sm:$0xff]
    %v1754 = vld [vmem:[#allocation8 + $0x70] sm:$0xff]
    %v1755 = vld [vmem:[#allocation8 + $0x78] sm:$0xff]
    %v1756 = vld [vmem:[#allocation8 + $0x80] sm:$0xff]
    %v1757 = vld [vmem:[#allocation8 + $0x88] sm:$0xff]
    %v1758 = vld [vmem:[#allocation8 + $0x90] sm:$0xff]
    %v1759 = vld [vmem:[#allocation8 + $0x98] sm:$0xff]
    %v1760 = vld [vmem:[#allocation8 + $0xa0] sm:$0xff]
    %v1761 = vld [vmem:[#allocation8 + $0xa8] sm:$0xff]
    %v1762 = vld [vmem:[#allocation8 + $0xb0] sm:$0xff]
    %v1763 = vld [vmem:[#allocation8 + $0xb8] sm:$0xff]
    %v1764 = vld [vmem:[#allocation8 + $0xc0] sm:$0xff]
    %v1765 = vld [vmem:[#allocation8 + $0xc8] sm:$0xff]
    %v1766 = vld [vmem:[#allocation8 + $0xd0] sm:$0xff]
    %v1767 = vld [vmem:[#allocation8 + $0xd8] sm:$0xff]
    %v1768 = vld [vmem:[#allocation8 + $0xe0] sm:$0xff]
    %v1769 = vld [vmem:[#allocation8 + $0xe8] sm:$0xff]
    %v1770 = vld [vmem:[#allocation8 + $0xf0] sm:$0xff]
    %v1771 = vld [vmem:[#allocation8 + $0xf8] sm:$0xff]
    %v1772 = vld [vmem:[#allocation8 + $0x100] sm:$0xff]
    %v1773 = vld [vmem:[#allocation8 + $0x108] sm:$0xff]
    %v1774 = vld [vmem:[#allocation8 + $0x110] sm:$0xff]
    %v1775 = vld [vmem:[#allocation8 + $0x118] sm:$0xff]
    %v1776 = vld [vmem:[#allocation8 + $0x120] sm:$0xff]
    %v1777 = vld [vmem:[#allocation8 + $0x128] sm:$0xff]
    %v1778 = vld [vmem:[#allocation8 + $0x130] sm:$0xff]
    %v1779 = vld [vmem:[#allocation8 + $0x138] sm:$0xff]
    %v1780 = vld [vmem:[#allocation8 + $0x140] sm:$0xff]
    %v1781 = vld [vmem:[#allocation8 + $0x148] sm:$0xff]
    %v1782 = vld [vmem:[#allocation8 + $0x150] sm:$0xff]
    %v1783 = vld [vmem:[#allocation8 + $0x158] sm:$0xff]
    %v1784 = vld [vmem:[#allocation8 + $0x160] sm:$0xff]
    %v1785 = vld [vmem:[#allocation8 + $0x168] sm:$0xff]
    %v1786 = vld [vmem:[#allocation8 + $0x170] sm:$0xff]
    %v1787 = vld [vmem:[#allocation8 + $0x178] sm:$0xff]
    %v1788 = vld [vmem:[#allocation8 + $0x180] sm:$0xff]
    %v1789 = vld [vmem:[#allocation8 + $0x188] sm:$0xff]
    %v1790 = vld [vmem:[#allocation8 + $0x190] sm:$0xff]
    %v1791 = vld [vmem:[#allocation8 + $0x198] sm:$0xff]
    %v1792 = vld [vmem:[#allocation8 + $0x1a0] sm:$0xff]
    %v1793 = vld [vmem:[#allocation8 + $0x1a8] sm:$0xff]
    %v1794 = vld [vmem:[#allocation8 + $0x1b0] sm:$0xff]
    %v1795 = vld [vmem:[#allocation8 + $0x1b8] sm:$0xff]
    %v1796 = vld [vmem:[#allocation8 + $0x1c0] sm:$0xff]
    %v1797 = vld [vmem:[#allocation8 + $0x1c8] sm:$0xff]
    %v1798 = vld [vmem:[#allocation8 + $0x1d0] sm:$0xff]
    %v1799 = vld [vmem:[#allocation8 + $0x1d8] sm:$0xff]
    %v1800 = vld [vmem:[#allocation8 + $0x1e0] sm:$0xff]
    %v1801 = vld [vmem:[#allocation8 + $0x1e8] sm:$0xff]
    %v1802 = vld [vmem:[#allocation8 + $0x1f0] sm:$0xff]
    %v1803 = vld [vmem:[#allocation8 + $0x1f8] sm:$0xff]
    %v1804 = vld [vmem:[%s6] sm:$0x3]
    %v1806 = vlaneseq
    %v1807 = vshrl.u32 %v1806, 7
    %v1808 = vsub.s32 0, %v1807
    %v1809 = vrot.slane %v1804, %v1808
    %v1810 = vlaneseq
    %v1811 = vshrl.u32 %v1810, 7
    %v1812 = vsub.s32 1, %v1811
    %v1813 = vrot.slane %v1804, %v1812
    %v1880 = vunpack.c.l.b16 %v1740
    %v1881 = vunpack.c.h.b16 %v1740
    %v1882 = vunpack.c.l.b16 %v1741
    %v1883 = vunpack.c.h.b16 %v1741
    %v1884 = vunpack.c.l.b16 %v1742
    %v1885 = vunpack.c.h.b16 %v1742
    %v1886 = vunpack.c.l.b16 %v1743
    %v1887 = vunpack.c.h.b16 %v1743
    %v1888 = vunpack.c.l.b16 %v1744
    %v1889 = vunpack.c.h.b16 %v1744
    %v1890 = vunpack.c.l.b16 %v1745
    %v1891 = vunpack.c.h.b16 %v1745
    %v1892 = vunpack.c.l.b16 %v1746
    %v1893 = vunpack.c.h.b16 %v1746
    %v1894 = vunpack.c.l.b16 %v1747
    %v1895 = vunpack.c.h.b16 %v1747
    %v1896 = vunpack.c.l.b16 %v1748
    %v1897 = vunpack.c.h.b16 %v1748
    %v1898 = vunpack.c.l.b16 %v1749
    %v1899 = vunpack.c.h.b16 %v1749
    %v1900 = vunpack.c.l.b16 %v1750
    %v1901 = vunpack.c.h.b16 %v1750
    %v1902 = vunpack.c.l.b16 %v1751
    %v1903 = vunpack.c.h.b16 %v1751
    %v1904 = vunpack.c.l.b16 %v1752
    %v1905 = vunpack.c.h.b16 %v1752
    %v1906 = vunpack.c.l.b16 %v1753
    %v1907 = vunpack.c.h.b16 %v1753
    %v1908 = vunpack.c.l.b16 %v1754
    %v1909 = vunpack.c.h.b16 %v1754
    %v1910 = vunpack.c.l.b16 %v1755
    %v1911 = vunpack.c.h.b16 %v1755
    %v1912 = vunpack.c.l.b16 %v1756
    %v1913 = vunpack.c.h.b16 %v1756
    %v1914 = vunpack.c.l.b16 %v1757
    %v1915 = vunpack.c.h.b16 %v1757
    %v1916 = vunpack.c.l.b16 %v1758
    %v1917 = vunpack.c.h.b16 %v1758
    %v1918 = vunpack.c.l.b16 %v1759
    %v1919 = vunpack.c.h.b16 %v1759
    %v1920 = vunpack.c.l.b16 %v1760
    %v1921 = vunpack.c.h.b16 %v1760
    %v1922 = vunpack.c.l.b16 %v1761
    %v1923 = vunpack.c.h.b16 %v1761
    %v1924 = vunpack.c.l.b16 %v1762
    %v1925 = vunpack.c.h.b16 %v1762
    %v1926 = vunpack.c.l.b16 %v1763
    %v1927 = vunpack.c.h.b16 %v1763
    %v1928 = vunpack.c.l.b16 %v1764
    %v1929 = vunpack.c.h.b16 %v1764
    %v1930 = vunpack.c.l.b16 %v1765
    %v1931 = vunpack.c.h.b16 %v1765
    %v1932 = vunpack.c.l.b16 %v1766
    %v1933 = vunpack.c.h.b16 %v1766
    %v1934 = vunpack.c.l.b16 %v1767
    %v1935 = vunpack.c.h.b16 %v1767
    %v1936 = vunpack.c.l.b16 %v1768
    %v1937 = vunpack.c.h.b16 %v1768
    %v1938 = vunpack.c.l.b16 %v1769
    %v1939 = vunpack.c.h.b16 %v1769
    %v1940 = vunpack.c.l.b16 %v1770
    %v1941 = vunpack.c.h.b16 %v1770
    %v1942 = vunpack.c.l.b16 %v1771
    %v1943 = vunpack.c.h.b16 %v1771
    %v1944 = vunpack.c.l.b16 %v1772
    %v1945 = vunpack.c.h.b16 %v1772
    %v1946 = vunpack.c.l.b16 %v1773
    %v1947 = vunpack.c.h.b16 %v1773
    %v1948 = vunpack.c.l.b16 %v1774
    %v1949 = vunpack.c.h.b16 %v1774
    %v1950 = vunpack.c.l.b16 %v1775
    %v1951 = vunpack.c.h.b16 %v1775
    %v1952 = vunpack.c.l.b16 %v1776
    %v1953 = vunpack.c.h.b16 %v1776
    %v1954 = vunpack.c.l.b16 %v1777
    %v1955 = vunpack.c.h.b16 %v1777
    %v1956 = vunpack.c.l.b16 %v1778
    %v1957 = vunpack.c.h.b16 %v1778
    %v1958 = vunpack.c.l.b16 %v1779
    %v1959 = vunpack.c.h.b16 %v1779
    %v1960 = vunpack.c.l.b16 %v1780
    %v1961 = vunpack.c.h.b16 %v1780
    %v1962 = vunpack.c.l.b16 %v1781
    %v1963 = vunpack.c.h.b16 %v1781
    %v1964 = vunpack.c.l.b16 %v1782
    %v1965 = vunpack.c.h.b16 %v1782
    %v1966 = vunpack.c.l.b16 %v1783
    %v1967 = vunpack.c.h.b16 %v1783
    %v1968 = vunpack.c.l.b16 %v1784
    %v1969 = vunpack.c.h.b16 %v1784
    %v1970 = vunpack.c.l.b16 %v1785
    %v1971 = vunpack.c.h.b16 %v1785
    %v1972 = vunpack.c.l.b16 %v1786
    %v1973 = vunpack.c.h.b16 %v1786
    %v1974 = vunpack.c.l.b16 %v1787
    %v1975 = vunpack.c.h.b16 %v1787
    %v1976 = vunpack.c.l.b16 %v1788
    %v1977 = vunpack.c.h.b16 %v1788
    %v1978 = vunpack.c.l.b16 %v1789
    %v1979 = vunpack.c.h.b16 %v1789
    %v1980 = vunpack.c.l.b16 %v1790
    %v1981 = vunpack.c.h.b16 %v1790
    %v1982 = vunpack.c.l.b16 %v1791
    %v1983 = vunpack.c.h.b16 %v1791
    %v1984 = vunpack.c.l.b16 %v1792
    %v1985 = vunpack.c.h.b16 %v1792
    %v1986 = vunpack.c.l.b16 %v1793
    %v1987 = vunpack.c.h.b16 %v1793
    %v1988 = vunpack.c.l.b16 %v1794
    %v1989 = vunpack.c.h.b16 %v1794
    %v1990 = vunpack.c.l.b16 %v1795
    %v1991 = vunpack.c.h.b16 %v1795
    %v1992 = vunpack.c.l.b16 %v1796
    %v1993 = vunpack.c.h.b16 %v1796
    %v1994 = vunpack.c.l.b16 %v1797
    %v1995 = vunpack.c.h.b16 %v1797
    %v1996 = vunpack.c.l.b16 %v1798
    %v1997 = vunpack.c.h.b16 %v1798
    %v1998 = vunpack.c.l.b16 %v1799
    %v1999 = vunpack.c.h.b16 %v1799
    %v2000 = vunpack.c.l.b16 %v1800
    %v2001 = vunpack.c.h.b16 %v1800
    %v2002 = vunpack.c.l.b16 %v1801
    %v2003 = vunpack.c.h.b16 %v1801
    %v2004 = vunpack.c.l.b16 %v1802
    %v2005 = vunpack.c.h.b16 %v1802
    %v2006 = vunpack.c.l.b16 %v1803
    %v2007 = vunpack.c.h.b16 %v1803
    %v2008 = vpack.c.b16 %v1882, %v1880
    %v2009 = vpack.c.b16 %v1883, %v1881
    %v2010 = vpack.c.b16 %v1886, %v1884
    %v2011 = vpack.c.b16 %v1887, %v1885
    %v2012 = vpack.c.b16 %v1890, %v1888
    %v2013 = vpack.c.b16 %v1891, %v1889
    %v2014 = vpack.c.b16 %v1894, %v1892
    %v2015 = vpack.c.b16 %v1895, %v1893
    %v2016 = vpack.c.b16 %v1898, %v1896
    %v2017 = vpack.c.b16 %v1899, %v1897
    %v2018 = vpack.c.b16 %v1902, %v1900
    %v2019 = vpack.c.b16 %v1903, %v1901
    %v2020 = vpack.c.b16 %v1906, %v1904
    %v2021 = vpack.c.b16 %v1907, %v1905
    %v2022 = vpack.c.b16 %v1910, %v1908
    %v2023 = vpack.c.b16 %v1911, %v1909
    %v2024 = vpack.c.b16 %v1914, %v1912
    %v2025 = vpack.c.b16 %v1915, %v1913
    %v2026 = vpack.c.b16 %v1918, %v1916
    %v2027 = vpack.c.b16 %v1919, %v1917
    %v2028 = vpack.c.b16 %v1922, %v1920
    %v2029 = vpack.c.b16 %v1923, %v1921
    %v2030 = vpack.c.b16 %v1926, %v1924
    %v2031 = vpack.c.b16 %v1927, %v1925
    %v2032 = vpack.c.b16 %v1930, %v1928
    %v2033 = vpack.c.b16 %v1931, %v1929
    %v2034 = vpack.c.b16 %v1934, %v1932
    %v2035 = vpack.c.b16 %v1935, %v1933
    %v2036 = vpack.c.b16 %v1938, %v1936
    %v2037 = vpack.c.b16 %v1939, %v1937
    %v2038 = vpack.c.b16 %v1942, %v1940
    %v2039 = vpack.c.b16 %v1943, %v1941
    %v2040 = vpack.c.b16 %v1946, %v1944
    %v2041 = vpack.c.b16 %v1947, %v1945
    %v2042 = vpack.c.b16 %v1950, %v1948
    %v2043 = vpack.c.b16 %v1951, %v1949
    %v2044 = vpack.c.b16 %v1954, %v1952
    %v2045 = vpack.c.b16 %v1955, %v1953
    %v2046 = vpack.c.b16 %v1958, %v1956
    %v2047 = vpack.c.b16 %v1959, %v1957
    %v2048 = vpack.c.b16 %v1962, %v1960
    %v2049 = vpack.c.b16 %v1963, %v1961
    %v2050 = vpack.c.b16 %v1966, %v1964
    %v2051 = vpack.c.b16 %v1967, %v1965
    %v2052 = vpack.c.b16 %v1970, %v1968
    %v2053 = vpack.c.b16 %v1971, %v1969
    %v2054 = vpack.c.b16 %v1974, %v1972
    %v2055 = vpack.c.b16 %v1975, %v1973
    %v2056 = vpack.c.b16 %v1978, %v1976
    %v2057 = vpack.c.b16 %v1979, %v1977
    %v2058 = vpack.c.b16 %v1982, %v1980
    %v2059 = vpack.c.b16 %v1983, %v1981
    %v2060 = vpack.c.b16 %v1986, %v1984
    %v2061 = vpack.c.b16 %v1987, %v1985
    %v2062 = vpack.c.b16 %v1990, %v1988
    %v2063 = vpack.c.b16 %v1991, %v1989
    %v2064 = vpack.c.b16 %v1994, %v1992
    %v2065 = vpack.c.b16 %v1995, %v1993
    %v2066 = vpack.c.b16 %v1998, %v1996
    %v2067 = vpack.c.b16 %v1999, %v1997
    %v2068 = vpack.c.b16 %v2002, %v2000
    %v2069 = vpack.c.b16 %v2003, %v2001
    %v2070 = vpack.c.b16 %v2006, %v2004
    %v2071 = vpack.c.b16 %v2007, %v2005
    %2136 = vmatprep.subr.bf16.mxu0 %v2009
    %2137 = vmatpush1.bf16.msra.mxu0 %v2008
    %2138 = vmatprep.subr.bf16.mxu0 %v2011
    %2139 = vmatpush1.bf16.msra.mxu0 %v2010
    %2140 = vmatprep.subr.bf16.mxu0 %v2013
    %2141 = vmatpush1.bf16.msra.mxu0 %v2012
    %2142 = vmatprep.subr.bf16.mxu0 %v2015
    %2143 = vmatpush1.bf16.msra.mxu0 %v2014
    %2144 = vmatprep.subr.bf16.mxu0 %v2017
    %2145 = vmatpush1.bf16.msra.mxu0 %v2016
    %2146 = vmatprep.subr.bf16.mxu0 %v2019
    %2147 = vmatpush1.bf16.msra.mxu0 %v2018
    %2148 = vmatprep.subr.bf16.mxu0 %v2021
    %2149 = vmatpush1.bf16.msra.mxu0 %v2020
    %2150 = vmatprep.subr.bf16.mxu0 %v2023
    %2151 = vmatpush1.bf16.msra.mxu0 %v2022
    %2152 = vmatprep.subr.bf16.mxu0 %v2025
    %2153 = vmatpush1.bf16.msra.mxu0 %v2024
    %2154 = vmatprep.subr.bf16.mxu0 %v2027
    %2155 = vmatpush1.bf16.msra.mxu0 %v2026
    %2156 = vmatprep.subr.bf16.mxu0 %v2029
    %2157 = vmatpush1.bf16.msra.mxu0 %v2028
    %2158 = vmatprep.subr.bf16.mxu0 %v2031
    %2159 = vmatpush1.bf16.msra.mxu0 %v2030
    %2160 = vmatprep.subr.bf16.mxu0 %v2033
    %2161 = vmatpush1.bf16.msra.mxu0 %v2032
    %2162 = vmatprep.subr.bf16.mxu0 %v2035
    %2163 = vmatpush1.bf16.msra.mxu0 %v2034
    %2164 = vmatprep.subr.bf16.mxu0 %v2037
    %2165 = vmatpush1.bf16.msra.mxu0 %v2036
    %2166 = vmatprep.subr.bf16.mxu0 %v2039
    %2167 = vmatpush1.bf16.msra.mxu0 %v2038
    %2168 = vmatprep.mubr.bf16.mxu0 %v1737
    %2169 = vmatmul.mubr.bf16.gmra.mrb[0].mxu0 %v1736
    %v2170 = vpop.f32.mrb[0].mxu0
    %v2171 = vadd.f32 %v1809, %v2170
    %v2172 = vpop.f32.mrb[0].mxu0
    %v2173 = vadd.f32 %v1813, %v2172
    %v2174 = vpop.f32.mrb[0].mxu0
    %v2175 = vadd.f32 %v1809, %v2174
    %v2176 = vpop.f32.mrb[0].mxu0
    %v2177 = vadd.f32 %v1813, %v2176
    %2178 = vdwg.mxu0
    %2179 = vmatprep.subr.bf16.mxu0 %v2041
    %2180 = vmatpush1.bf16.msra.mxu0 %v2040
    %2181 = vmatprep.subr.bf16.mxu0 %v2043
    %2182 = vmatpush1.bf16.msra.mxu0 %v2042
    %2183 = vmatprep.subr.bf16.mxu0 %v2045
    %2184 = vmatpush1.bf16.msra.mxu0 %v2044
    %2185 = vmatprep.subr.bf16.mxu0 %v2047
    %2186 = vmatpush1.bf16.msra.mxu0 %v2046
    %2187 = vmatprep.subr.bf16.mxu0 %v2049
    %2188 = vmatpush1.bf16.msra.mxu0 %v2048
    %2189 = vmatprep.subr.bf16.mxu0 %v2051
    %2190 = vmatpush1.bf16.msra.mxu0 %v2050
    %2191 = vmatprep.subr.bf16.mxu0 %v2053
    %2192 = vmatpush1.bf16.msra.mxu0 %v2052
    %2193 = vmatprep.subr.bf16.mxu0 %v2055
    %2194 = vmatpush1.bf16.msra.mxu0 %v2054
    %2195 = vmatprep.subr.bf16.mxu0 %v2057
    %2196 = vmatpush1.bf16.msra.mxu0 %v2056
    %2197 = vmatprep.subr.bf16.mxu0 %v2059
    %2198 = vmatpush1.bf16.msra.mxu0 %v2058
    %2199 = vmatprep.subr.bf16.mxu0 %v2061
    %2200 = vmatpush1.bf16.msra.mxu0 %v2060
    %2201 = vmatprep.subr.bf16.mxu0 %v2063
    %2202 = vmatpush1.bf16.msra.mxu0 %v2062
    %2203 = vmatprep.subr.bf16.mxu0 %v2065
    %2204 = vmatpush1.bf16.msra.mxu0 %v2064
    %2205 = vmatprep.subr.bf16.mxu0 %v2067
    %2206 = vmatpush1.bf16.msra.mxu0 %v2066
    %2207 = vmatprep.subr.bf16.mxu0 %v2069
    %2208 = vmatpush1.bf16.msra.mxu0 %v2068
    %2209 = vmatprep.subr.bf16.mxu0 %v2071
    %2210 = vmatpush1.bf16.msra.mxu0 %v2070
    %2211 = vmatprep.mubr.bf16.mxu0 %v1739
    %2212 = vmatmul.mubr.bf16.gmra.mrb[0].mxu0 %v1738
    %v2213 = vpop.f32.mrb[0].mxu0
    %v2214 = vadd.f32 %v2171, %v2213
    %v2215 = vpop.f32.mrb[0].mxu0
    %v2216 = vadd.f32 %v2173, %v2215
    %v2217 = vpop.f32.mrb[0].mxu0
    %v2218 = vadd.f32 %v2175, %v2217
    %v2219 = vpop.f32.mrb[0].mxu0
    %v2220 = vadd.f32 %v2177, %v2219
    %2221 = vdwg.mxu0
    %v2222 = vmul.f32 %v2214, 0.5
    %v2223 = vmul.f32 %v2216, 0.5
    %v2224 = vmul.f32 %v2218, 0.5
    %v2225 = vmul.f32 %v2220, 0.5
    %v2226 = vmul.f32 %v2214, 0.044715
    %v2227 = vmul.f32 %v2216, 0.044715
    %v2228 = vmul.f32 %v2218, 0.044715
    %v2229 = vmul.f32 %v2220, 0.044715
    %v2230 = vmul.f32 %v2226, %v2214
    %v2231 = vmul.f32 %v2227, %v2216
    %v2232 = vmul.f32 %v2228, %v2218
    %v2233 = vmul.f32 %v2229, %v2220
    %v2234 = vmul.f32 %v2230, %v2214
    %v2235 = vmul.f32 %v2231, %v2216
    %v2236 = vmul.f32 %v2232, %v2218
    %v2237 = vmul.f32 %v2233, %v2220
    %v2238 = vadd.f32 %v2214, %v2234
    %v2239 = vadd.f32 %v2216, %v2235
    %v2240 = vadd.f32 %v2218, %v2236
    %v2241 = vadd.f32 %v2220, %v2237
    %v2242 = vmul.f32 %v2238, 0.7978846
    %v2243 = vmul.f32 %v2239, 0.7978846
    %v2244 = vmul.f32 %v2240, 0.7978846
    %v2245 = vmul.f32 %v2241, 0.7978846
    %v2246 = vtanh.pop %v2242
    %v2247 = vtanh.pop %v2243
    %v2248 = vtanh.pop %v2244
    %v2249 = vtanh.pop %v2245
    %v2250 = vadd.f32 %v2246, 1.0
    %v2251 = vadd.f32 %v2247, 1.0
    %v2252 = vadd.f32 %v2248, 1.0
    %v2253 = vadd.f32 %v2249, 1.0
    %v2254 = vmul.f32 %v2222, %v2250
    %v2255 = vmul.f32 %v2223, %v2251
    %v2256 = vmul.f32 %v2224, %v2252
    %v2257 = vmul.f32 %v2225, %v2253
    %v2258 = vpack.c.bf16 %v2256, %v2254
    %v2259 = vpack.c.bf16 %v2257, %v2255
    %v2260 = vld [vmem:[#allocation10] sm:$0xf]
    %v2261 = vld [vmem:[#allocation10 + $0x4] sm:$0xf]
    %v2262 = vld [vmem:[#allocation10 + $0x8] sm:$0xf]
    %v2263 = vld [vmem:[#allocation10 + $0xc] sm:$0xf]
    %v2264 = vld [vmem:[#allocation10 + $0x10] sm:$0xf]
    %v2265 = vld [vmem:[#allocation10 + $0x14] sm:$0xf]
    %v2266 = vld [vmem:[#allocation10 + $0x18] sm:$0xf]
    %v2267 = vld [vmem:[#allocation10 + $0x1c] sm:$0xf]
    %v2268 = vld [vmem:[#allocation10 + $0x20] sm:$0xf]
    %v2269 = vld [vmem:[#allocation10 + $0x24] sm:$0xf]
    %v2270 = vld [vmem:[#allocation10 + $0x28] sm:$0xf]
    %v2271 = vld [vmem:[#allocation10 + $0x2c] sm:$0xf]
    %v2272 = vld [vmem:[#allocation10 + $0x30] sm:$0xf]
    %v2273 = vld [vmem:[#allocation10 + $0x34] sm:$0xf]
    %v2274 = vld [vmem:[#allocation10 + $0x38] sm:$0xf]
    %v2275 = vld [vmem:[#allocation10 + $0x3c] sm:$0xf]
    %v2276 = vld [vmem:[#allocation10 + $0x40] sm:$0xf]
    %v2277 = vld [vmem:[#allocation10 + $0x44] sm:$0xf]
    %v2278 = vld [vmem:[#allocation10 + $0x48] sm:$0xf]
    %v2279 = vld [vmem:[#allocation10 + $0x4c] sm:$0xf]
    %v2280 = vld [vmem:[#allocation10 + $0x50] sm:$0xf]
    %v2281 = vld [vmem:[#allocation10 + $0x54] sm:$0xf]
    %v2282 = vld [vmem:[#allocation10 + $0x58] sm:$0xf]
    %v2283 = vld [vmem:[#allocation10 + $0x5c] sm:$0xf]
    %v2284 = vld [vmem:[#allocation10 + $0x60] sm:$0xf]
    %v2285 = vld [vmem:[#allocation10 + $0x64] sm:$0xf]
    %v2286 = vld [vmem:[#allocation10 + $0x68] sm:$0xf]
    %v2287 = vld [vmem:[#allocation10 + $0x6c] sm:$0xf]
    %v2288 = vld [vmem:[#allocation10 + $0x70] sm:$0xf]
    %v2289 = vld [vmem:[#allocation10 + $0x74] sm:$0xf]
    %v2290 = vld [vmem:[#allocation10 + $0x78] sm:$0xf]
    %v2291 = vld [vmem:[#allocation10 + $0x7c] sm:$0xf]
    %v2292 = vld [vmem:[%s8] sm:$0x1]
    %v2294 = vlaneseq
    %v2295 = vshrl.u32 %v2294, 7
    %v2296 = vsub.s32 0, %v2295
    %v2297 = vrot.slane %v2292, %v2296
    %v2331 = vunpack.c.l.b16 %v2260
    %v2332 = vunpack.c.l.b16 %v2261
    %v2333 = vunpack.c.l.b16 %v2262
    %v2334 = vunpack.c.l.b16 %v2263
    %v2335 = vunpack.c.l.b16 %v2264
    %v2336 = vunpack.c.l.b16 %v2265
    %v2337 = vunpack.c.l.b16 %v2266
    %v2338 = vunpack.c.l.b16 %v2267
    %v2339 = vunpack.c.l.b16 %v2268
    %v2340 = vunpack.c.l.b16 %v2269
    %v2341 = vunpack.c.l.b16 %v2270
    %v2342 = vunpack.c.l.b16 %v2271
    %v2343 = vunpack.c.l.b16 %v2272
    %v2344 = vunpack.c.l.b16 %v2273
    %v2345 = vunpack.c.l.b16 %v2274
    %v2346 = vunpack.c.l.b16 %v2275
    %v2347 = vunpack.c.l.b16 %v2276
    %v2348 = vunpack.c.l.b16 %v2277
    %v2349 = vunpack.c.l.b16 %v2278
    %v2350 = vunpack.c.l.b16 %v2279
    %v2351 = vunpack.c.l.b16 %v2280
    %v2352 = vunpack.c.l.b16 %v2281
    %v2353 = vunpack.c.l.b16 %v2282
    %v2354 = vunpack.c.l.b16 %v2283
    %v2355 = vunpack.c.l.b16 %v2284
    %v2356 = vunpack.c.l.b16 %v2285
    %v2357 = vunpack.c.l.b16 %v2286
    %v2358 = vunpack.c.l.b16 %v2287
    %v2359 = vunpack.c.l.b16 %v2288
    %v2360 = vunpack.c.l.b16 %v2289
    %v2361 = vunpack.c.l.b16 %v2290
    %v2362 = vunpack.c.l.b16 %v2291
    %v2363 = vpack.c.b16 %v2332, %v2331
    %v2364 = vpack.c.b16 %v2334, %v2333
    %v2365 = vpack.c.b16 %v2336, %v2335
    %v2366 = vpack.c.b16 %v2338, %v2337
    %v2367 = vpack.c.b16 %v2340, %v2339
    %v2368 = vpack.c.b16 %v2342, %v2341
    %v2369 = vpack.c.b16 %v2344, %v2343
    %v2370 = vpack.c.b16 %v2346, %v2345
    %v2371 = vpack.c.b16 %v2348, %v2347
    %v2372 = vpack.c.b16 %v2350, %v2349
    %v2373 = vpack.c.b16 %v2352, %v2351
    %v2374 = vpack.c.b16 %v2354, %v2353
    %v2375 = vpack.c.b16 %v2356, %v2355
    %v2376 = vpack.c.b16 %v2358, %v2357
    %v2377 = vpack.c.b16 %v2360, %v2359
    %v2378 = vpack.c.b16 %v2362, %v2361
    %2395 = vmatprep.subr.bf16.mxu0 0
    %2396 = vmatpush1.bf16.msra.mxu0 %v2363
    %2397 = vmatprep.subr.bf16.mxu0 0
    %2398 = vmatpush1.bf16.msra.mxu0 %v2364
    %2399 = vmatprep.subr.bf16.mxu0 0
    %2400 = vmatpush1.bf16.msra.mxu0 %v2365
    %2401 = vmatprep.subr.bf16.mxu0 0
    %2402 = vmatpush1.bf16.msra.mxu0 %v2366
    %2403 = vmatprep.subr.bf16.mxu0 0
    %2404 = vmatpush1.bf16.msra.mxu0 %v2367
    %2405 = vmatprep.subr.bf16.mxu0 0
    %2406 = vmatpush1.bf16.msra.mxu0 %v2368
    %2407 = vmatprep.subr.bf16.mxu0 0
    %2408 = vmatpush1.bf16.msra.mxu0 %v2369
    %2409 = vmatprep.subr.bf16.mxu0 0
    %2410 = vmatpush1.bf16.msra.mxu0 %v2370
    %2411 = vmatprep.subr.bf16.mxu0 0
    %2412 = vmatpush1.bf16.msra.mxu0 %v2371
    %2413 = vmatprep.subr.bf16.mxu0 0
    %2414 = vmatpush1.bf16.msra.mxu0 %v2372
    %2415 = vmatprep.subr.bf16.mxu0 0
    %2416 = vmatpush1.bf16.msra.mxu0 %v2373
    %2417 = vmatprep.subr.bf16.mxu0 0
    %2418 = vmatpush1.bf16.msra.mxu0 %v2374
    %2419 = vmatprep.subr.bf16.mxu0 0
    %2420 = vmatpush1.bf16.msra.mxu0 %v2375
    %2421 = vmatprep.subr.bf16.mxu0 0
    %2422 = vmatpush1.bf16.msra.mxu0 %v2376
    %2423 = vmatprep.subr.bf16.mxu0 0
    %2424 = vmatpush1.bf16.msra.mxu0 %v2377
    %2425 = vmatprep.subr.bf16.mxu0 0
    %2426 = vmatpush1.bf16.msra.mxu0 %v2378
    %2427 = vmatprep.mubr.bf16.mxu0 %v2259
    %2428 = vmatmul.mubr.bf16.gmra.mrb[0].mxu0 %v2258
    %v2429 = vpop.f32.mrb[0].mxu0
    %v2430 = vadd.f32 %v2297, %v2429
    %v2431 = vpop.f32.mrb[0].mxu0
    %v2432 = vpop.f32.mrb[0].mxu0
    %v2433 = vadd.f32 %v2297, %v2432
    %v2434 = vpop.f32.mrb[0].mxu0
    %2435 = vdwg.mxu0
    %v2436 = vmul.f32 %v2430, 0.5
    %v2437 = vmul.f32 %v2433, 0.5
    %v2438 = vmul.f32 %v2430, 0.044715
    %v2439 = vmul.f32 %v2433, 0.044715
    %v2440 = vmul.f32 %v2438, %v2430
    %v2441 = vmul.f32 %v2439, %v2433
    %v2442 = vmul.f32 %v2440, %v2430
    %v2443 = vmul.f32 %v2441, %v2433
    %v2444 = vadd.f32 %v2430, %v2442
    %v2445 = vadd.f32 %v2433, %v2443
    %v2446 = vmul.f32 %v2444, 0.7978846
    %v2447 = vmul.f32 %v2445, 0.7978846
    %v2448 = vtanh.pop %v2446
    %v2449 = vtanh.pop %v2447
    %v2450 = vadd.f32 %v2448, 1.0
    %v2451 = vadd.f32 %v2449, 1.0
    %v2452 = vmul.f32 %v2436, %v2450
    %v2453 = vmul.f32 %v2437, %v2451
    %v2454 = vpack.c.bf16 %v2453, %v2452
    %v2455 = vld [vmem:[#allocation11] sm:$0xf]
    %v2456 = vld [vmem:[#allocation11 + $0x4] sm:$0xf]
    %v2457 = vld [vmem:[#allocation11 + $0x8] sm:$0xf]
    %v2458 = vld [vmem:[#allocation11 + $0xc] sm:$0xf]
    %v2459 = vld [vmem:[#allocation11 + $0x10] sm:$0xf]
    %v2460 = vld [vmem:[#allocation11 + $0x14] sm:$0xf]
    %v2461 = vld [vmem:[#allocation11 + $0x18] sm:$0xf]
    %v2462 = vld [vmem:[#allocation11 + $0x1c] sm:$0xf]
    %v2463 = vld [vmem:[#allocation11 + $0x20] sm:$0xf]
    %v2464 = vld [vmem:[#allocation11 + $0x24] sm:$0xf]
    %v2465 = vld [vmem:[#allocation11 + $0x28] sm:$0xf]
    %v2466 = vld [vmem:[#allocation11 + $0x2c] sm:$0xf]
    %v2467 = vld [vmem:[#allocation11 + $0x30] sm:$0xf]
    %v2468 = vld [vmem:[#allocation11 + $0x34] sm:$0xf]
    %v2469 = vld [vmem:[#allocation11 + $0x38] sm:$0xf]
    %v2470 = vld [vmem:[#allocation11 + $0x3c] sm:$0xf]
    %v2471 = vld [vmem:[%s10] sm:$0x1]
    %v2473 = vlaneseq
    %v2474 = vshrl.u32 %v2473, 7
    %v2475 = vsub.s32 0, %v2474
    %v2476 = vrot.slane %v2471, %v2475
    %v2494 = vunpack.c.l.b16 %v2455
    %v2495 = vunpack.c.l.b16 %v2456
    %v2496 = vunpack.c.l.b16 %v2457
    %v2497 = vunpack.c.l.b16 %v2458
    %v2498 = vunpack.c.l.b16 %v2459
    %v2499 = vunpack.c.l.b16 %v2460
    %v2500 = vunpack.c.l.b16 %v2461
    %v2501 = vunpack.c.l.b16 %v2462
    %v2502 = vunpack.c.l.b16 %v2463
    %v2503 = vunpack.c.l.b16 %v2464
    %v2504 = vunpack.c.l.b16 %v2465
    %v2505 = vunpack.c.l.b16 %v2466
    %v2506 = vunpack.c.l.b16 %v2467
    %v2507 = vunpack.c.l.b16 %v2468
    %v2508 = vunpack.c.l.b16 %v2469
    %v2509 = vunpack.c.l.b16 %v2470
    %v2510 = vpack.c.b16 %v2495, %v2494
    %v2511 = vpack.c.b16 %v2497, %v2496
    %v2512 = vpack.c.b16 %v2499, %v2498
    %v2513 = vpack.c.b16 %v2501, %v2500
    %v2514 = vpack.c.b16 %v2503, %v2502
    %v2515 = vpack.c.b16 %v2505, %v2504
    %v2516 = vpack.c.b16 %v2507, %v2506
    %v2517 = vpack.c.b16 %v2509, %v2508
    %2526 = vmatprep.subr.bf16.mxu0 0
    %2527 = vmatpush1.bf16.msra.mxu0 %v2510
    %2528 = vmatprep.subr.bf16.mxu0 0
    %2529 = vmatpush1.bf16.msra.mxu0 %v2511
    %2530 = vmatprep.subr.bf16.mxu0 0
    %2531 = vmatpush1.bf16.msra.mxu0 %v2512
    %2532 = vmatprep.subr.bf16.mxu0 0
    %2533 = vmatpush1.bf16.msra.mxu0 %v2513
    %2534 = vmatprep.subr.bf16.mxu0 0
    %2535 = vmatpush1.bf16.msra.mxu0 %v2514
    %2536 = vmatprep.subr.bf16.mxu0 0
    %2537 = vmatpush1.bf16.msra.mxu0 %v2515
    %2538 = vmatprep.subr.bf16.mxu0 0
    %2539 = vmatpush1.bf16.msra.mxu0 %v2516
    %2540 = vmatprep.subr.bf16.mxu0 0
    %2541 = vmatpush1.bf16.msra.mxu0 %v2517
    %2542 = vmatprep.subr.bf16.mxu0 0
    %2543 = vmatpush1.bf16.msra.mxu0 0
    %2544 = vmatprep.subr.bf16.mxu0 0
    %2545 = vmatpush1.bf16.msra.mxu0 0
    %2546 = vmatprep.subr.bf16.mxu0 0
    %2547 = vmatpush1.bf16.msra.mxu0 0
    %2548 = vmatprep.subr.bf16.mxu0 0
    %2549 = vmatpush1.bf16.msra.mxu0 0
    %2550 = vmatprep.subr.bf16.mxu0 0
    %2551 = vmatpush1.bf16.msra.mxu0 0
    %2552 = vmatprep.subr.bf16.mxu0 0
    %2553 = vmatpush1.bf16.msra.mxu0 0
    %2554 = vmatprep.subr.bf16.mxu0 0
    %2555 = vmatpush1.bf16.msra.mxu0 0
    %2556 = vmatprep.subr.bf16.mxu0 0
    %2557 = vmatpush1.bf16.msra.mxu0 0
    %2558 = vmatprep.mubr.bf16.mxu0 0
    %2559 = vmatmul.mubr.bf16.gmra.mrb[0].mxu0 %v2454
    %v2560 = vpop.f32.mrb[0].mxu0
    %v2561 = vadd.f32 %v2476, %v2560
    %v2562 = vpop.f32.mrb[0].mxu0
    %v2563 = vpop.f32.mrb[0].mxu0
    %v2564 = vadd.f32 %v2476, %v2563
    %v2565 = vpop.f32.mrb[0].mxu0
    %2566 = vdwg.mxu0
    %2567 = vst [vmem:[#allocation13] sm:$0xff] %v2561
    %2568 = vst [vmem:[#allocation13 + $0x8] sm:$0xff] %v2564
    // Predicated region
    $region70: #{tpu_custom_call.1} parent=1 // pred_check
      _
    $region71: #{tpu_custom_call.1} parent=1 // pred_check_branch
      %2570 = sbr.rel (0) target = $region73
    $region72: #{tpu_custom_call.1} parent=1 // pred_region
      %s2572 = ssub.s32 256, 256
      %2573 = vsyncadd [#allocation4], %s2572
      %s2574 = sshll.u32 [#allocation13], 4
      %s2575 = int_to_ptr.vmem [resolvable:$true] %s2574
      %2580 = dma.vmem_to_hbm [thread:$0]  %s2575, 256, %s11, [#allocation4], 128, 128, 8
    $region73: #{tpu_custom_call.1} parent=1 // pred_fallthru
      _
    // Predicated region
    $region74: #{tpu_custom_call.1} parent=1 // pred_check
      _
    $region75: #{tpu_custom_call.1} parent=1 // pred_check_branch
      %2582 = sbr.rel (0) target = $region77
    $region76: #{tpu_custom_call.1} parent=1 // pred_region
      %2583 = dma.done [#allocation4], 256
    $region77: #{tpu_custom_call.1} parent=1 // pred_fallthru
      _
    %2584 = vsyncpa [#allocation3], 1
    %2585 = vsyncpa [#allocation6], 1
    %2586 = vsyncpa [#allocation9], 1
    %2587 = vsyncpa [#allocation12], 1
    %2588 = vsyncpa [#allocation4], 1

</llo_original>
